<compile_context>
chip_gen: v7x
topology: tpu7x:2x2x1
jax: 0.10.0
libtpu: 0.0.40
codegen_flags: <defaults>
</compile_context>

<pallas_src>
import functools

import numpy as np
import jax
import jax.numpy as jnp
from jax.experimental import pallas as pl
from jax.experimental.pallas import tpu as pltpu

VMEM = pltpu.MemorySpace.VMEM
LN_EPS = 1e-6
LANE = 128


def _vspec():
    # Everything here fits comfortably in VMEM: block == array, single grid step.
    return pl.BlockSpec(memory_space=VMEM)


def _round_up(x, m):
    return (x + m - 1) // m * m


def _ln(x, g, b, eps):
    mu = jnp.mean(x, axis=-1, keepdims=True)
    var = jnp.mean(jnp.square(x - mu), axis=-1, keepdims=True)
    return (x - mu) * jax.lax.rsqrt(var + eps) * g + b


# ---------------------------------------------------------------------------
# One fused kernel: stem matmul + LN + depthwise 7x7 + LN + pw1(GELU) + pw2 +
# layer-scale residual + global avg-pool + LN + classifier.
# ---------------------------------------------------------------------------
def _convnext_fused_kernel(
    patches_ref,     # (R, KP)    bf16  zero-padded 4x4 patches
    stem_w_ref,      # (KP, D)    bf16
    pvec_ref,        # (16, D)    f32   packed per-channel param vectors
    mw_ref,          # (49*R, D)  f32   per-tap (halo-mask * dw-weight) table
    pw1_w_ref,       # (D, HID)   bf16
    pw1_b_ref,       # (1, HID)   f32
    pw2_w_ref,       # (HID, D)   bf16
    head_w_ref,      # (D, NCP)   bf16  classifier, zero-padded to NCP lanes
    head_bias_ref,   # (1, NCP)   f32
    o_ref,           # (BP, NCP)  f32   BP = batch padded to 8 sublanes
    *, B, HW, Wp, eps,
):
    R = patches_ref.shape[0]
    D = stem_w_ref.shape[1]
    BP = o_ref.shape[0]

    # Packed (1, D) parameter rows (static sublane slices of one VMEM value).
    pv = pvec_ref[...]
    stem_b, stem_g, stem_beta = pv[0:1], pv[1:2], pv[2:3]
    dw_b, blk_g, blk_beta = pv[3:4], pv[4:5], pv[5:6]
    pw2_b, ls = pv[6:7], pv[7:8]
    head_g, head_beta = pv[8:9], pv[9:10]

    # ---- Stem: 4x4 stride-4 conv as a patch matmul (bf16 MXU, f32 acc) + LN.
    feat = jnp.dot(patches_ref[...], stem_w_ref[...],
                   preferred_element_type=jnp.float32) + stem_b
    feat = _ln(feat, stem_g, stem_beta, eps)                          # (R, D) f32

    # ---- Depthwise 7x7, pad 3: each tap is an XLU sublane roll of the
    # VMEM-resident activation times a precomputed masked-weight row block
    # (static slice -> zero-cost view).  4 independent accumulators break the
    # 49-long serial add chain so the VALUs can co-issue taps.
    accs = [jnp.zeros((R, D), jnp.float32) for _ in range(4)]
    for ky in range(7):
        for kx in range(7):
            t = ky * 7 + kx
            s = (ky - 3) * Wp + (kx - 3)                              # row shift
            shifted = feat if s == 0 else pltpu.roll(feat, (-s) % R, axis=0)
            accs[t % 4] = accs[t % 4] + shifted * mw_ref[t * R:(t + 1) * R, :]
    dw = (accs[0] + accs[1]) + (accs[2] + accs[3]) + dw_b

    # ---- LN -> pw1 (GELU) -> pw2 -> layer-scale residual, all VMEM-resident.
    h = _ln(dw, blk_g, blk_beta, eps)
    h = jnp.dot(h.astype(jnp.bfloat16), pw1_w_ref[...],
                preferred_element_type=jnp.float32) + pw1_b_ref[...]
    # TODO(synk): torch.nn.GELU defaults to erf; tanh approximation keeps it on the EUP.
    h = jax.nn.gelu(h, approximate=True)
    h = jnp.dot(h.astype(jnp.bfloat16), pw2_w_ref[...],
                preferred_element_type=jnp.float32) + pw2_b
    blk = feat + ls * h                                               # (R, D)

    # ---- Head: global average pool (single fused sublane reduce) -> LN ->
    # classifier; pad the batch rows to BP so the final store is unmasked.
    pooled = jnp.mean(blk.reshape(B, HW, D), axis=1)                  # (B, D)
    if B < BP:
        pooled = jnp.concatenate(
            [pooled, jnp.zeros((BP - B, D), jnp.float32)], axis=0)    # (BP, D)
    normed = _ln(pooled, head_g, head_beta, eps)
    logits = jnp.dot(normed.astype(jnp.bfloat16), head_w_ref[...],
                     preferred_element_type=jnp.float32) + head_bias_ref[...]
    o_ref[...] = logits.astype(o_ref.dtype)


# ---------------------------------------------------------------------------
# Parameters (synthetic, deterministic) and wrapper glue.
# ---------------------------------------------------------------------------
def init_params(key, in_ch, dim, hidden, num_classes, patch=4):
    ks = jax.random.split(key, 5)
    s = 0.02
    kpatch = in_ch * patch * patch
    return {
        "stem_w": s * jax.random.normal(ks[0], (kpatch, dim), jnp.float32),
        "stem_b": jnp.zeros((1, dim), jnp.float32),
        "stem_ln_g": jnp.ones((1, dim), jnp.float32),
        "stem_ln_b": jnp.zeros((1, dim), jnp.float32),
        "dw_w": s * jax.random.normal(ks[1], (49, dim), jnp.float32),
        "dw_b": jnp.zeros((1, dim), jnp.float32),
        "blk_ln_g": jnp.ones((1, dim), jnp.float32),
        "blk_ln_b": jnp.zeros((1, dim), jnp.float32),
        "pw1_w": s * jax.random.normal(ks[2], (dim, hidden), jnp.float32),
        "pw1_b": jnp.zeros((1, hidden), jnp.float32),
        "pw2_w": s * jax.random.normal(ks[3], (hidden, dim), jnp.float32),
        "pw2_b": jnp.zeros((1, dim), jnp.float32),
        "layer_scale": jnp.full((1, dim), 1e-6, jnp.float32),
        "head_ln_g": jnp.ones((1, dim), jnp.float32),
        "head_ln_b": jnp.zeros((1, dim), jnp.float32),
        "head_w": s * jax.random.normal(ks[4], (dim, num_classes), jnp.float32),
        "head_b": jnp.zeros((1, num_classes), jnp.float32),
    }


def _dw_halo_mask(batch, hp, wp, k=7):
    """(rows, 49) 0/1 mask: tap (ky,kx) valid at output pixel (y,x)."""
    rows = batch * hp * wp
    mask = np.zeros((rows, k * k), np.float32)
    half = k // 2
    for b in range(batch):
        for y in range(hp):
            for x in range(wp):
                r = b * hp * wp + y * wp + x
                for ky in range(k):
                    for kx in range(k):
                        if 0 <= y + ky - half < hp and 0 <= x + kx - half < wp:
                            mask[r, ky * k + kx] = 1.0
    return mask


def forward(params, x_nchw, num_classes):
    # Boundary transpose: NCHW (PyTorch convention) -> NHWC (channels on lanes).
    x = jnp.transpose(x_nchw, (0, 2, 3, 1)).astype(jnp.float32)
    B, H, W, C = x.shape
    patch = 4
    Hp, Wp = H // patch, W // patch
    HW, R = Hp * Wp, B * Hp * Wp
    D = params["stem_w"].shape[1]

    # Patchify (4x4 stride 4); zero-pad the patch (K) dim to a lane-dense 128.
    patches = x.reshape(B, Hp, patch, Wp, patch, C).transpose(0, 1, 3, 2, 4, 5)
    patches = patches.reshape(R, patch * patch * C)
    KP = _round_up(patches.shape[1], LANE)
    patches = jnp.pad(patches, ((0, 0), (0, KP - patches.shape[1])))
    stem_w = jnp.pad(params["stem_w"],
                     ((0, KP - params["stem_w"].shape[0]), (0, 0)))

    # Zero-pad the classifier to a lane-dense output; slice back afterwards.
    NCP = _round_up(num_classes, LANE)
    head_w = jnp.pad(params["head_w"], ((0, 0), (0, NCP - num_classes)))
    head_b = jnp.pad(params["head_b"], ((0, 0), (0, NCP - num_classes)))

    # Precomputed per-tap masked depthwise weights: mw[t*R + r, :] =
    # mask[r, t] * w[t, :].  ~784 KiB f32 at this size -> trivially VMEM-resident.
    # TODO(synk): at real row counts this table scales with R; generate the halo
    # mask in-kernel (broadcasted_iota) for boundary row-tiles only at scale.
    dw_mask = jnp.asarray(_dw_halo_mask(B, Hp, Wp))                   # (R, 49)
    mw = dw_mask[:, :, None] * params["dw_w"][None, :, :]             # (R, 49, D)
    mw = jnp.transpose(mw, (1, 0, 2)).reshape(49 * R, D)              # (49R, D)

    # Pack the ten (1, D) f32 parameter vectors into one (16, D) input
    # (collapses ~10 tiny DMAs into 1; rows sliced statically in-kernel).
    pvec = jnp.concatenate(
        [params["stem_b"], params["stem_ln_g"], params["stem_ln_b"],
         params["dw_b"], params["blk_ln_g"], params["blk_ln_b"],
         params["pw2_b"], params["layer_scale"],
         params["head_ln_g"], params["head_ln_b"]], axis=0)           # (10, D)
    pvec = jnp.pad(pvec, ((0, 16 - pvec.shape[0]), (0, 0)))           # (16, D)

    BP = _round_up(max(B, 8), 8)                                      # sublane-dense store

    bf16 = jnp.bfloat16
    kernel = functools.partial(_convnext_fused_kernel,
                               B=B, HW=HW, Wp=Wp, eps=LN_EPS)
    logits = pl.pallas_call(
        kernel,
        out_shape=jax.ShapeDtypeStruct((BP, NCP), jnp.float32),
        in_specs=[_vspec()] * 9,
        out_specs=_vspec(),
    )(
        patches.astype(bf16), stem_w.astype(bf16),
        pvec, mw,
        params["pw1_w"].astype(bf16), params["pw1_b"],
        params["pw2_w"].astype(bf16),
        head_w.astype(bf16), head_b,
    )
    return logits[:B, :num_classes]


if __name__ == "__main__":
    B, C, H, W = 2, 3, 16, 16                    # small NCHW input
    DIM, HIDDEN, NUM_CLASSES = 128, 512, 10      # lane-dense channel dims

    key = jax.random.PRNGKey(0)
    k_x, k_p = jax.random.split(key)
    x = jax.random.normal(k_x, (B, C, H, W), jnp.float32)
    params = init_params(k_p, C, DIM, HIDDEN, NUM_CLASSES)

    out = jax.jit(functools.partial(forward, num_classes=NUM_CLASSES))(params, x)
    out = jax.block_until_ready(out)
    assert out.shape == (B, NUM_CLASSES) and out.dtype == jnp.float32
    assert bool(jnp.all(jnp.isfinite(out)))
    print("KERNEL_OK")
</pallas_src>

<mosaic_0001>
module attributes {stable_mosaic.version = 11 : i64} {
  func.func @_convnext_fused_kernel(%arg0: memref<32x128xbf16, #tpu.memory_space<vmem>>, %arg1: memref<128x128xbf16, #tpu.memory_space<vmem>>, %arg2: memref<16x128xf32, #tpu.memory_space<vmem>>, %arg3: memref<1568x128xf32, #tpu.memory_space<vmem>>, %arg4: memref<128x512xbf16, #tpu.memory_space<vmem>>, %arg5: memref<1x512xf32, #tpu.memory_space<vmem>>, %arg6: memref<512x128xbf16, #tpu.memory_space<vmem>>, %arg7: memref<128x128xbf16, #tpu.memory_space<vmem>>, %arg8: memref<1x128xf32, #tpu.memory_space<vmem>>, %arg9: memref<8x128xf32, #tpu.memory_space<vmem>>) attributes {dimension_semantics = [], scalar_prefetch = 0 : i64, scratch_operands = 0 : i64, tpu.core_type = #tpu.core_type<tc>} {
    %c0 = arith.constant 0 : index
    %c0_0 = arith.constant 0 : index
    %0 = vector.load %arg2[%c0, %c0_0] : memref<16x128xf32, #tpu.memory_space<vmem>>, vector<16x128xf32>
    %1 = vector.extract_strided_slice %0 {offsets = [0, 0], sizes = [1, 128], strides = [1, 1]} : vector<16x128xf32> to vector<1x128xf32>
    %2 = vector.extract_strided_slice %0 {offsets = [1, 0], sizes = [1, 128], strides = [1, 1]} : vector<16x128xf32> to vector<1x128xf32>
    %3 = vector.extract_strided_slice %0 {offsets = [2, 0], sizes = [1, 128], strides = [1, 1]} : vector<16x128xf32> to vector<1x128xf32>
    %4 = vector.extract_strided_slice %0 {offsets = [3, 0], sizes = [1, 128], strides = [1, 1]} : vector<16x128xf32> to vector<1x128xf32>
    %5 = vector.extract_strided_slice %0 {offsets = [4, 0], sizes = [1, 128], strides = [1, 1]} : vector<16x128xf32> to vector<1x128xf32>
    %6 = vector.extract_strided_slice %0 {offsets = [5, 0], sizes = [1, 128], strides = [1, 1]} : vector<16x128xf32> to vector<1x128xf32>
    %7 = vector.extract_strided_slice %0 {offsets = [6, 0], sizes = [1, 128], strides = [1, 1]} : vector<16x128xf32> to vector<1x128xf32>
    %8 = vector.extract_strided_slice %0 {offsets = [7, 0], sizes = [1, 128], strides = [1, 1]} : vector<16x128xf32> to vector<1x128xf32>
    %9 = vector.extract_strided_slice %0 {offsets = [8, 0], sizes = [1, 128], strides = [1, 1]} : vector<16x128xf32> to vector<1x128xf32>
    %10 = vector.extract_strided_slice %0 {offsets = [9, 0], sizes = [1, 128], strides = [1, 1]} : vector<16x128xf32> to vector<1x128xf32>
    %c0_1 = arith.constant 0 : index
    %c0_2 = arith.constant 0 : index
    %11 = vector.load %arg0[%c0_1, %c0_2] : memref<32x128xbf16, #tpu.memory_space<vmem>>, vector<32x128xbf16>
    %c0_3 = arith.constant 0 : index
    %c0_4 = arith.constant 0 : index
    %12 = vector.load %arg1[%c0_3, %c0_4] : memref<128x128xbf16, #tpu.memory_space<vmem>>, vector<128x128xbf16>
    %cst = arith.constant dense<0.000000e+00> : vector<32x128xf32>
    %13 = tpu.matmul %11, %12, %cst {dimension_numbers = #tpu.dot_dimension_numbers<[1], [0], [0], [1], [0, 0, 1, 1], [], []>} : vector<32x128xbf16>, vector<128x128xbf16>, vector<32x128xf32> -> vector<32x128xf32>
    %14 = vector.broadcast %1 : vector<1x128xf32> to vector<32x128xf32>
    %15 = arith.addf %13, %14 : vector<32x128xf32>
    %cst_5 = arith.constant dense<0.000000e+00> : vector<32xf32>
    %16 = vector.multi_reduction <add>, %15, %cst_5 [1] : vector<32x128xf32> to vector<32xf32>
    %17 = vector.shape_cast %16 : vector<32xf32> to vector<32x1xf32>
    %cst_6 = arith.constant 1.280000e+02 : f32
    %18 = vector.broadcast %cst_6 : f32 to vector<32x1xf32>
    %19 = arith.divf %17, %18 : vector<32x1xf32>
    %20 = vector.broadcast %19 : vector<32x1xf32> to vector<32x128xf32>
    %21 = arith.subf %15, %20 : vector<32x128xf32>
    %22 = arith.mulf %21, %21 : vector<32x128xf32>
    %cst_7 = arith.constant dense<0.000000e+00> : vector<32xf32>
    %23 = vector.multi_reduction <add>, %22, %cst_7 [1] : vector<32x128xf32> to vector<32xf32>
    %24 = vector.shape_cast %23 : vector<32xf32> to vector<32x1xf32>
    %cst_8 = arith.constant 1.280000e+02 : f32
    %25 = vector.broadcast %cst_8 : f32 to vector<32x1xf32>
    %26 = arith.divf %24, %25 : vector<32x1xf32>
    %27 = vector.broadcast %19 : vector<32x1xf32> to vector<32x128xf32>
    %28 = arith.subf %15, %27 : vector<32x128xf32>
    %cst_9 = arith.constant 9.99999997E-7 : f32
    %29 = vector.broadcast %cst_9 : f32 to vector<32x1xf32>
    %30 = arith.addf %26, %29 : vector<32x1xf32>
    %31 = math.rsqrt %30 : vector<32x1xf32>
    %32 = vector.broadcast %31 : vector<32x1xf32> to vector<32x128xf32>
    %33 = arith.mulf %28, %32 : vector<32x128xf32>
    %34 = vector.broadcast %2 : vector<1x128xf32> to vector<32x128xf32>
    %35 = arith.mulf %33, %34 : vector<32x128xf32>
    %36 = vector.broadcast %3 : vector<1x128xf32> to vector<32x128xf32>
    %37 = arith.addf %35, %36 : vector<32x128xf32>
    %cst_10 = arith.constant 0.000000e+00 : f32
    %38 = vector.broadcast %cst_10 : f32 to vector<32x128xf32>
    %cst_11 = arith.constant 0.000000e+00 : f32
    %39 = vector.broadcast %cst_11 : f32 to vector<32x128xf32>
    %cst_12 = arith.constant 0.000000e+00 : f32
    %40 = vector.broadcast %cst_12 : f32 to vector<32x128xf32>
    %cst_13 = arith.constant 0.000000e+00 : f32
    %41 = vector.broadcast %cst_13 : f32 to vector<32x128xf32>
    %c15_i32 = arith.constant 15 : i32
    %42 = tpu.dynamic_rotate %37 by %c15_i32 dim 0 : vector<32x128xf32>, i32 -> vector<32x128xf32>
    %c0_14 = arith.constant 0 : index
    %c0_15 = arith.constant 0 : index
    %43 = vector.load %arg3[%c0_14, %c0_15] : memref<1568x128xf32, #tpu.memory_space<vmem>>, vector<32x128xf32>
    %44 = arith.mulf %42, %43 : vector<32x128xf32>
    %45 = arith.addf %38, %44 : vector<32x128xf32>
    %c14_i32 = arith.constant 14 : i32
    %46 = tpu.dynamic_rotate %37 by %c14_i32 dim 0 : vector<32x128xf32>, i32 -> vector<32x128xf32>
    %c32 = arith.constant 32 : index
    %c0_16 = arith.constant 0 : index
    %47 = vector.load %arg3[%c32, %c0_16] : memref<1568x128xf32, #tpu.memory_space<vmem>>, vector<32x128xf32>
    %48 = arith.mulf %46, %47 : vector<32x128xf32>
    %49 = arith.addf %39, %48 : vector<32x128xf32>
    %c13_i32 = arith.constant 13 : i32
    %50 = tpu.dynamic_rotate %37 by %c13_i32 dim 0 : vector<32x128xf32>, i32 -> vector<32x128xf32>
    %c64 = arith.constant 64 : index
    %c0_17 = arith.constant 0 : index
    %51 = vector.load %arg3[%c64, %c0_17] : memref<1568x128xf32, #tpu.memory_space<vmem>>, vector<32x128xf32>
    %52 = arith.mulf %50, %51 : vector<32x128xf32>
    %53 = arith.addf %40, %52 : vector<32x128xf32>
    %c12_i32 = arith.constant 12 : i32
    %54 = tpu.dynamic_rotate %37 by %c12_i32 dim 0 : vector<32x128xf32>, i32 -> vector<32x128xf32>
    %c96 = arith.constant 96 : index
    %c0_18 = arith.constant 0 : index
    %55 = vector.load %arg3[%c96, %c0_18] : memref<1568x128xf32, #tpu.memory_space<vmem>>, vector<32x128xf32>
    %56 = arith.mulf %54, %55 : vector<32x128xf32>
    %57 = arith.addf %41, %56 : vector<32x128xf32>
    %c11_i32 = arith.constant 11 : i32
    %58 = tpu.dynamic_rotate %37 by %c11_i32 dim 0 : vector<32x128xf32>, i32 -> vector<32x128xf32>
    %c128 = arith.constant 128 : index
    %c0_19 = arith.constant 0 : index
    %59 = vector.load %arg3[%c128, %c0_19] : memref<1568x128xf32, #tpu.memory_space<vmem>>, vector<32x128xf32>
    %60 = arith.mulf %58, %59 : vector<32x128xf32>
    %61 = arith.addf %45, %60 : vector<32x128xf32>
    %c10_i32 = arith.constant 10 : i32
    %62 = tpu.dynamic_rotate %37 by %c10_i32 dim 0 : vector<32x128xf32>, i32 -> vector<32x128xf32>
    %c160 = arith.constant 160 : index
    %c0_20 = arith.constant 0 : index
    %63 = vector.load %arg3[%c160, %c0_20] : memref<1568x128xf32, #tpu.memory_space<vmem>>, vector<32x128xf32>
    %64 = arith.mulf %62, %63 : vector<32x128xf32>
    %65 = arith.addf %49, %64 : vector<32x128xf32>
    %c9_i32 = arith.constant 9 : i32
    %66 = tpu.dynamic_rotate %37 by %c9_i32 dim 0 : vector<32x128xf32>, i32 -> vector<32x128xf32>
    %c192 = arith.constant 192 : index
    %c0_21 = arith.constant 0 : index
    %67 = vector.load %arg3[%c192, %c0_21] : memref<1568x128xf32, #tpu.memory_space<vmem>>, vector<32x128xf32>
    %68 = arith.mulf %66, %67 : vector<32x128xf32>
    %69 = arith.addf %53, %68 : vector<32x128xf32>
    %c11_i32_22 = arith.constant 11 : i32
    %70 = tpu.dynamic_rotate %37 by %c11_i32_22 dim 0 : vector<32x128xf32>, i32 -> vector<32x128xf32>
    %c224 = arith.constant 224 : index
    %c0_23 = arith.constant 0 : index
    %71 = vector.load %arg3[%c224, %c0_23] : memref<1568x128xf32, #tpu.memory_space<vmem>>, vector<32x128xf32>
    %72 = arith.mulf %70, %71 : vector<32x128xf32>
    %73 = arith.addf %57, %72 : vector<32x128xf32>
    %c10_i32_24 = arith.constant 10 : i32
    %74 = tpu.dynamic_rotate %37 by %c10_i32_24 dim 0 : vector<32x128xf32>, i32 -> vector<32x128xf32>
    %c256 = arith.constant 256 : index
    %c0_25 = arith.constant 0 : index
    %75 = vector.load %arg3[%c256, %c0_25] : memref<1568x128xf32, #tpu.memory_space<vmem>>, vector<32x128xf32>
    %76 = arith.mulf %74, %75 : vector<32x128xf32>
    %77 = arith.addf %61, %76 : vector<32x128xf32>
    %c9_i32_26 = arith.constant 9 : i32
    %78 = tpu.dynamic_rotate %37 by %c9_i32_26 dim 0 : vector<32x128xf32>, i32 -> vector<32x128xf32>
    %c288 = arith.constant 288 : index
    %c0_27 = arith.constant 0 : index
    %79 = vector.load %arg3[%c288, %c0_27] : memref<1568x128xf32, #tpu.memory_space<vmem>>, vector<32x128xf32>
    %80 = arith.mulf %78, %79 : vector<32x128xf32>
    %81 = arith.addf %65, %80 : vector<32x128xf32>
    %c8_i32 = arith.constant 8 : i32
    %82 = tpu.dynamic_rotate %37 by %c8_i32 dim 0 : vector<32x128xf32>, i32 -> vector<32x128xf32>
    %c320 = arith.constant 320 : index
    %c0_28 = arith.constant 0 : index
    %83 = vector.load %arg3[%c320, %c0_28] : memref<1568x128xf32, #tpu.memory_space<vmem>>, vector<32x128xf32>
    %84 = arith.mulf %82, %83 : vector<32x128xf32>
    %85 = arith.addf %69, %84 : vector<32x128xf32>
    %c7_i32 = arith.constant 7 : i32
    %86 = tpu.dynamic_rotate %37 by %c7_i32 dim 0 : vector<32x128xf32>, i32 -> vector<32x128xf32>
    %c352 = arith.constant 352 : index
    %c0_29 = arith.constant 0 : index
    %87 = vector.load %arg3[%c352, %c0_29] : memref<1568x128xf32, #tpu.memory_space<vmem>>, vector<32x128xf32>
    %88 = arith.mulf %86, %87 : vector<32x128xf32>
    %89 = arith.addf %73, %88 : vector<32x128xf32>
    %c6_i32 = arith.constant 6 : i32
    %90 = tpu.dynamic_rotate %37 by %c6_i32 dim 0 : vector<32x128xf32>, i32 -> vector<32x128xf32>
    %c384 = arith.constant 384 : index
    %c0_30 = arith.constant 0 : index
    %91 = vector.load %arg3[%c384, %c0_30] : memref<1568x128xf32, #tpu.memory_space<vmem>>, vector<32x128xf32>
    %92 = arith.mulf %90, %91 : vector<32x128xf32>
    %93 = arith.addf %77, %92 : vector<32x128xf32>
    %c5_i32 = arith.constant 5 : i32
    %94 = tpu.dynamic_rotate %37 by %c5_i32 dim 0 : vector<32x128xf32>, i32 -> vector<32x128xf32>
    %c416 = arith.constant 416 : index
    %c0_31 = arith.constant 0 : index
    %95 = vector.load %arg3[%c416, %c0_31] : memref<1568x128xf32, #tpu.memory_space<vmem>>, vector<32x128xf32>
    %96 = arith.mulf %94, %95 : vector<32x128xf32>
    %97 = arith.addf %81, %96 : vector<32x128xf32>
    %c7_i32_32 = arith.constant 7 : i32
    %98 = tpu.dynamic_rotate %37 by %c7_i32_32 dim 0 : vector<32x128xf32>, i32 -> vector<32x128xf32>
    %c448 = arith.constant 448 : index
    %c0_33 = arith.constant 0 : index
    %99 = vector.load %arg3[%c448, %c0_33] : memref<1568x128xf32, #tpu.memory_space<vmem>>, vector<32x128xf32>
    %100 = arith.mulf %98, %99 : vector<32x128xf32>
    %101 = arith.addf %85, %100 : vector<32x128xf32>
    %c6_i32_34 = arith.constant 6 : i32
    %102 = tpu.dynamic_rotate %37 by %c6_i32_34 dim 0 : vector<32x128xf32>, i32 -> vector<32x128xf32>
    %c480 = arith.constant 480 : index
    %c0_35 = arith.constant 0 : index
    %103 = vector.load %arg3[%c480, %c0_35] : memref<1568x128xf32, #tpu.memory_space<vmem>>, vector<32x128xf32>
    %104 = arith.mulf %102, %103 : vector<32x128xf32>
    %105 = arith.addf %89, %104 : vector<32x128xf32>
    %c5_i32_36 = arith.constant 5 : i32
    %106 = tpu.dynamic_rotate %37 by %c5_i32_36 dim 0 : vector<32x128xf32>, i32 -> vector<32x128xf32>
    %c512 = arith.constant 512 : index
    %c0_37 = arith.constant 0 : index
    %107 = vector.load %arg3[%c512, %c0_37] : memref<1568x128xf32, #tpu.memory_space<vmem>>, vector<32x128xf32>
    %108 = arith.mulf %106, %107 : vector<32x128xf32>
    %109 = arith.addf %93, %108 : vector<32x128xf32>
    %c4_i32 = arith.constant 4 : i32
    %110 = tpu.dynamic_rotate %37 by %c4_i32 dim 0 : vector<32x128xf32>, i32 -> vector<32x128xf32>
    %c544 = arith.constant 544 : index
    %c0_38 = arith.constant 0 : index
    %111 = vector.load %arg3[%c544, %c0_38] : memref<1568x128xf32, #tpu.memory_space<vmem>>, vector<32x128xf32>
    %112 = arith.mulf %110, %111 : vector<32x128xf32>
    %113 = arith.addf %97, %112 : vector<32x128xf32>
    %c3_i32 = arith.constant 3 : i32
    %114 = tpu.dynamic_rotate %37 by %c3_i32 dim 0 : vector<32x128xf32>, i32 -> vector<32x128xf32>
    %c576 = arith.constant 576 : index
    %c0_39 = arith.constant 0 : index
    %115 = vector.load %arg3[%c576, %c0_39] : memref<1568x128xf32, #tpu.memory_space<vmem>>, vector<32x128xf32>
    %116 = arith.mulf %114, %115 : vector<32x128xf32>
    %117 = arith.addf %101, %116 : vector<32x128xf32>
    %c2_i32 = arith.constant 2 : i32
    %118 = tpu.dynamic_rotate %37 by %c2_i32 dim 0 : vector<32x128xf32>, i32 -> vector<32x128xf32>
    %c608 = arith.constant 608 : index
    %c0_40 = arith.constant 0 : index
    %119 = vector.load %arg3[%c608, %c0_40] : memref<1568x128xf32, #tpu.memory_space<vmem>>, vector<32x128xf32>
    %120 = arith.mulf %118, %119 : vector<32x128xf32>
    %121 = arith.addf %105, %120 : vector<32x128xf32>
    %c1_i32 = arith.constant 1 : i32
    %122 = tpu.dynamic_rotate %37 by %c1_i32 dim 0 : vector<32x128xf32>, i32 -> vector<32x128xf32>
    %c640 = arith.constant 640 : index
    %c0_41 = arith.constant 0 : index
    %123 = vector.load %arg3[%c640, %c0_41] : memref<1568x128xf32, #tpu.memory_space<vmem>>, vector<32x128xf32>
    %124 = arith.mulf %122, %123 : vector<32x128xf32>
    %125 = arith.addf %109, %124 : vector<32x128xf32>
    %c3_i32_42 = arith.constant 3 : i32
    %126 = tpu.dynamic_rotate %37 by %c3_i32_42 dim 0 : vector<32x128xf32>, i32 -> vector<32x128xf32>
    %c672 = arith.constant 672 : index
    %c0_43 = arith.constant 0 : index
    %127 = vector.load %arg3[%c672, %c0_43] : memref<1568x128xf32, #tpu.memory_space<vmem>>, vector<32x128xf32>
    %128 = arith.mulf %126, %127 : vector<32x128xf32>
    %129 = arith.addf %113, %128 : vector<32x128xf32>
    %c2_i32_44 = arith.constant 2 : i32
    %130 = tpu.dynamic_rotate %37 by %c2_i32_44 dim 0 : vector<32x128xf32>, i32 -> vector<32x128xf32>
    %c704 = arith.constant 704 : index
    %c0_45 = arith.constant 0 : index
    %131 = vector.load %arg3[%c704, %c0_45] : memref<1568x128xf32, #tpu.memory_space<vmem>>, vector<32x128xf32>
    %132 = arith.mulf %130, %131 : vector<32x128xf32>
    %133 = arith.addf %117, %132 : vector<32x128xf32>
    %c1_i32_46 = arith.constant 1 : i32
    %134 = tpu.dynamic_rotate %37 by %c1_i32_46 dim 0 : vector<32x128xf32>, i32 -> vector<32x128xf32>
    %c736 = arith.constant 736 : index
    %c0_47 = arith.constant 0 : index
    %135 = vector.load %arg3[%c736, %c0_47] : memref<1568x128xf32, #tpu.memory_space<vmem>>, vector<32x128xf32>
    %136 = arith.mulf %134, %135 : vector<32x128xf32>
    %137 = arith.addf %121, %136 : vector<32x128xf32>
    %c768 = arith.constant 768 : index
    %c0_48 = arith.constant 0 : index
    %138 = vector.load %arg3[%c768, %c0_48] : memref<1568x128xf32, #tpu.memory_space<vmem>>, vector<32x128xf32>
    %139 = arith.mulf %37, %138 : vector<32x128xf32>
    %140 = arith.addf %125, %139 : vector<32x128xf32>
    %c31_i32 = arith.constant 31 : i32
    %141 = tpu.dynamic_rotate %37 by %c31_i32 dim 0 : vector<32x128xf32>, i32 -> vector<32x128xf32>
    %c800 = arith.constant 800 : index
    %c0_49 = arith.constant 0 : index
    %142 = vector.load %arg3[%c800, %c0_49] : memref<1568x128xf32, #tpu.memory_space<vmem>>, vector<32x128xf32>
    %143 = arith.mulf %141, %142 : vector<32x128xf32>
    %144 = arith.addf %129, %143 : vector<32x128xf32>
    %c30_i32 = arith.constant 30 : i32
    %145 = tpu.dynamic_rotate %37 by %c30_i32 dim 0 : vector<32x128xf32>, i32 -> vector<32x128xf32>
    %c832 = arith.constant 832 : index
    %c0_50 = arith.constant 0 : index
    %146 = vector.load %arg3[%c832, %c0_50] : memref<1568x128xf32, #tpu.memory_space<vmem>>, vector<32x128xf32>
    %147 = arith.mulf %145, %146 : vector<32x128xf32>
    %148 = arith.addf %133, %147 : vector<32x128xf32>
    %c29_i32 = arith.constant 29 : i32
    %149 = tpu.dynamic_rotate %37 by %c29_i32 dim 0 : vector<32x128xf32>, i32 -> vector<32x128xf32>
    %c864 = arith.constant 864 : index
    %c0_51 = arith.constant 0 : index
    %150 = vector.load %arg3[%c864, %c0_51] : memref<1568x128xf32, #tpu.memory_space<vmem>>, vector<32x128xf32>
    %151 = arith.mulf %149, %150 : vector<32x128xf32>
    %152 = arith.addf %137, %151 : vector<32x128xf32>
    %c31_i32_52 = arith.constant 31 : i32
    %153 = tpu.dynamic_rotate %37 by %c31_i32_52 dim 0 : vector<32x128xf32>, i32 -> vector<32x128xf32>
    %c896 = arith.constant 896 : index
    %c0_53 = arith.constant 0 : index
    %154 = vector.load %arg3[%c896, %c0_53] : memref<1568x128xf32, #tpu.memory_space<vmem>>, vector<32x128xf32>
    %155 = arith.mulf %153, %154 : vector<32x128xf32>
    %156 = arith.addf %140, %155 : vector<32x128xf32>
    %c30_i32_54 = arith.constant 30 : i32
    %157 = tpu.dynamic_rotate %37 by %c30_i32_54 dim 0 : vector<32x128xf32>, i32 -> vector<32x128xf32>
    %c928 = arith.constant 928 : index
    %c0_55 = arith.constant 0 : index
    %158 = vector.load %arg3[%c928, %c0_55] : memref<1568x128xf32, #tpu.memory_space<vmem>>, vector<32x128xf32>
    %159 = arith.mulf %157, %158 : vector<32x128xf32>
    %160 = arith.addf %144, %159 : vector<32x128xf32>
    %c29_i32_56 = arith.constant 29 : i32
    %161 = tpu.dynamic_rotate %37 by %c29_i32_56 dim 0 : vector<32x128xf32>, i32 -> vector<32x128xf32>
    %c960 = arith.constant 960 : index
    %c0_57 = arith.constant 0 : index
    %162 = vector.load %arg3[%c960, %c0_57] : memref<1568x128xf32, #tpu.memory_space<vmem>>, vector<32x128xf32>
    %163 = arith.mulf %161, %162 : vector<32x128xf32>
    %164 = arith.addf %148, %163 : vector<32x128xf32>
    %c28_i32 = arith.constant 28 : i32
    %165 = tpu.dynamic_rotate %37 by %c28_i32 dim 0 : vector<32x128xf32>, i32 -> vector<32x128xf32>
    %c992 = arith.constant 992 : index
    %c0_58 = arith.constant 0 : index
    %166 = vector.load %arg3[%c992, %c0_58] : memref<1568x128xf32, #tpu.memory_space<vmem>>, vector<32x128xf32>
    %167 = arith.mulf %165, %166 : vector<32x128xf32>
    %168 = arith.addf %152, %167 : vector<32x128xf32>
    %c27_i32 = arith.constant 27 : i32
    %169 = tpu.dynamic_rotate %37 by %c27_i32 dim 0 : vector<32x128xf32>, i32 -> vector<32x128xf32>
    %c1024 = arith.constant 1024 : index
    %c0_59 = arith.constant 0 : index
    %170 = vector.load %arg3[%c1024, %c0_59] : memref<1568x128xf32, #tpu.memory_space<vmem>>, vector<32x128xf32>
    %171 = arith.mulf %169, %170 : vector<32x128xf32>
    %172 = arith.addf %156, %171 : vector<32x128xf32>
    %c26_i32 = arith.constant 26 : i32
    %173 = tpu.dynamic_rotate %37 by %c26_i32 dim 0 : vector<32x128xf32>, i32 -> vector<32x128xf32>
    %c1056 = arith.constant 1056 : index
    %c0_60 = arith.constant 0 : index
    %174 = vector.load %arg3[%c1056, %c0_60] : memref<1568x128xf32, #tpu.memory_space<vmem>>, vector<32x128xf32>
    %175 = arith.mulf %173, %174 : vector<32x128xf32>
    %176 = arith.addf %160, %175 : vector<32x128xf32>
    %c25_i32 = arith.constant 25 : i32
    %177 = tpu.dynamic_rotate %37 by %c25_i32 dim 0 : vector<32x128xf32>, i32 -> vector<32x128xf32>
    %c1088 = arith.constant 1088 : index
    %c0_61 = arith.constant 0 : index
    %178 = vector.load %arg3[%c1088, %c0_61] : memref<1568x128xf32, #tpu.memory_space<vmem>>, vector<32x128xf32>
    %179 = arith.mulf %177, %178 : vector<32x128xf32>
    %180 = arith.addf %164, %179 : vector<32x128xf32>
    %c27_i32_62 = arith.constant 27 : i32
    %181 = tpu.dynamic_rotate %37 by %c27_i32_62 dim 0 : vector<32x128xf32>, i32 -> vector<32x128xf32>
    %c1120 = arith.constant 1120 : index
    %c0_63 = arith.constant 0 : index
    %182 = vector.load %arg3[%c1120, %c0_63] : memref<1568x128xf32, #tpu.memory_space<vmem>>, vector<32x128xf32>
    %183 = arith.mulf %181, %182 : vector<32x128xf32>
    %184 = arith.addf %168, %183 : vector<32x128xf32>
    %c26_i32_64 = arith.constant 26 : i32
    %185 = tpu.dynamic_rotate %37 by %c26_i32_64 dim 0 : vector<32x128xf32>, i32 -> vector<32x128xf32>
    %c1152 = arith.constant 1152 : index
    %c0_65 = arith.constant 0 : index
    %186 = vector.load %arg3[%c1152, %c0_65] : memref<1568x128xf32, #tpu.memory_space<vmem>>, vector<32x128xf32>
    %187 = arith.mulf %185, %186 : vector<32x128xf32>
    %188 = arith.addf %172, %187 : vector<32x128xf32>
    %c25_i32_66 = arith.constant 25 : i32
    %189 = tpu.dynamic_rotate %37 by %c25_i32_66 dim 0 : vector<32x128xf32>, i32 -> vector<32x128xf32>
    %c1184 = arith.constant 1184 : index
    %c0_67 = arith.constant 0 : index
    %190 = vector.load %arg3[%c1184, %c0_67] : memref<1568x128xf32, #tpu.memory_space<vmem>>, vector<32x128xf32>
    %191 = arith.mulf %189, %190 : vector<32x128xf32>
    %192 = arith.addf %176, %191 : vector<32x128xf32>
    %c24_i32 = arith.constant 24 : i32
    %193 = tpu.dynamic_rotate %37 by %c24_i32 dim 0 : vector<32x128xf32>, i32 -> vector<32x128xf32>
    %c1216 = arith.constant 1216 : index
    %c0_68 = arith.constant 0 : index
    %194 = vector.load %arg3[%c1216, %c0_68] : memref<1568x128xf32, #tpu.memory_space<vmem>>, vector<32x128xf32>
    %195 = arith.mulf %193, %194 : vector<32x128xf32>
    %196 = arith.addf %180, %195 : vector<32x128xf32>
    %c23_i32 = arith.constant 23 : i32
    %197 = tpu.dynamic_rotate %37 by %c23_i32 dim 0 : vector<32x128xf32>, i32 -> vector<32x128xf32>
    %c1248 = arith.constant 1248 : index
    %c0_69 = arith.constant 0 : index
    %198 = vector.load %arg3[%c1248, %c0_69] : memref<1568x128xf32, #tpu.memory_space<vmem>>, vector<32x128xf32>
    %199 = arith.mulf %197, %198 : vector<32x128xf32>
    %200 = arith.addf %184, %199 : vector<32x128xf32>
    %c22_i32 = arith.constant 22 : i32
    %201 = tpu.dynamic_rotate %37 by %c22_i32 dim 0 : vector<32x128xf32>, i32 -> vector<32x128xf32>
    %c1280 = arith.constant 1280 : index
    %c0_70 = arith.constant 0 : index
    %202 = vector.load %arg3[%c1280, %c0_70] : memref<1568x128xf32, #tpu.memory_space<vmem>>, vector<32x128xf32>
    %203 = arith.mulf %201, %202 : vector<32x128xf32>
    %204 = arith.addf %188, %203 : vector<32x128xf32>
    %c21_i32 = arith.constant 21 : i32
    %205 = tpu.dynamic_rotate %37 by %c21_i32 dim 0 : vector<32x128xf32>, i32 -> vector<32x128xf32>
    %c1312 = arith.constant 1312 : index
    %c0_71 = arith.constant 0 : index
    %206 = vector.load %arg3[%c1312, %c0_71] : memref<1568x128xf32, #tpu.memory_space<vmem>>, vector<32x128xf32>
    %207 = arith.mulf %205, %206 : vector<32x128xf32>
    %208 = arith.addf %192, %207 : vector<32x128xf32>
    %c23_i32_72 = arith.constant 23 : i32
    %209 = tpu.dynamic_rotate %37 by %c23_i32_72 dim 0 : vector<32x128xf32>, i32 -> vector<32x128xf32>
    %c1344 = arith.constant 1344 : index
    %c0_73 = arith.constant 0 : index
    %210 = vector.load %arg3[%c1344, %c0_73] : memref<1568x128xf32, #tpu.memory_space<vmem>>, vector<32x128xf32>
    %211 = arith.mulf %209, %210 : vector<32x128xf32>
    %212 = arith.addf %196, %211 : vector<32x128xf32>
    %c22_i32_74 = arith.constant 22 : i32
    %213 = tpu.dynamic_rotate %37 by %c22_i32_74 dim 0 : vector<32x128xf32>, i32 -> vector<32x128xf32>
    %c1376 = arith.constant 1376 : index
    %c0_75 = arith.constant 0 : index
    %214 = vector.load %arg3[%c1376, %c0_75] : memref<1568x128xf32, #tpu.memory_space<vmem>>, vector<32x128xf32>
    %215 = arith.mulf %213, %214 : vector<32x128xf32>
    %216 = arith.addf %200, %215 : vector<32x128xf32>
    %c21_i32_76 = arith.constant 21 : i32
    %217 = tpu.dynamic_rotate %37 by %c21_i32_76 dim 0 : vector<32x128xf32>, i32 -> vector<32x128xf32>
    %c1408 = arith.constant 1408 : index
    %c0_77 = arith.constant 0 : index
    %218 = vector.load %arg3[%c1408, %c0_77] : memref<1568x128xf32, #tpu.memory_space<vmem>>, vector<32x128xf32>
    %219 = arith.mulf %217, %218 : vector<32x128xf32>
    %220 = arith.addf %204, %219 : vector<32x128xf32>
    %c20_i32 = arith.constant 20 : i32
    %221 = tpu.dynamic_rotate %37 by %c20_i32 dim 0 : vector<32x128xf32>, i32 -> vector<32x128xf32>
    %c1440 = arith.constant 1440 : index
    %c0_78 = arith.constant 0 : index
    %222 = vector.load %arg3[%c1440, %c0_78] : memref<1568x128xf32, #tpu.memory_space<vmem>>, vector<32x128xf32>
    %223 = arith.mulf %221, %222 : vector<32x128xf32>
    %224 = arith.addf %208, %223 : vector<32x128xf32>
    %c19_i32 = arith.constant 19 : i32
    %225 = tpu.dynamic_rotate %37 by %c19_i32 dim 0 : vector<32x128xf32>, i32 -> vector<32x128xf32>
    %c1472 = arith.constant 1472 : index
    %c0_79 = arith.constant 0 : index
    %226 = vector.load %arg3[%c1472, %c0_79] : memref<1568x128xf32, #tpu.memory_space<vmem>>, vector<32x128xf32>
    %227 = arith.mulf %225, %226 : vector<32x128xf32>
    %228 = arith.addf %212, %227 : vector<32x128xf32>
    %c18_i32 = arith.constant 18 : i32
    %229 = tpu.dynamic_rotate %37 by %c18_i32 dim 0 : vector<32x128xf32>, i32 -> vector<32x128xf32>
    %c1504 = arith.constant 1504 : index
    %c0_80 = arith.constant 0 : index
    %230 = vector.load %arg3[%c1504, %c0_80] : memref<1568x128xf32, #tpu.memory_space<vmem>>, vector<32x128xf32>
    %231 = arith.mulf %229, %230 : vector<32x128xf32>
    %232 = arith.addf %216, %231 : vector<32x128xf32>
    %c17_i32 = arith.constant 17 : i32
    %233 = tpu.dynamic_rotate %37 by %c17_i32 dim 0 : vector<32x128xf32>, i32 -> vector<32x128xf32>
    %c1536 = arith.constant 1536 : index
    %c0_81 = arith.constant 0 : index
    %234 = vector.load %arg3[%c1536, %c0_81] : memref<1568x128xf32, #tpu.memory_space<vmem>>, vector<32x128xf32>
    %235 = arith.mulf %233, %234 : vector<32x128xf32>
    %236 = arith.addf %220, %235 : vector<32x128xf32>
    %237 = arith.addf %236, %224 : vector<32x128xf32>
    %238 = arith.addf %228, %232 : vector<32x128xf32>
    %239 = arith.addf %237, %238 : vector<32x128xf32>
    %240 = vector.broadcast %4 : vector<1x128xf32> to vector<32x128xf32>
    %241 = arith.addf %239, %240 : vector<32x128xf32>
    %cst_82 = arith.constant dense<0.000000e+00> : vector<32xf32>
    %242 = vector.multi_reduction <add>, %241, %cst_82 [1] : vector<32x128xf32> to vector<32xf32>
    %243 = vector.shape_cast %242 : vector<32xf32> to vector<32x1xf32>
    %cst_83 = arith.constant 1.280000e+02 : f32
    %244 = vector.broadcast %cst_83 : f32 to vector<32x1xf32>
    %245 = arith.divf %243, %244 : vector<32x1xf32>
    %246 = vector.broadcast %245 : vector<32x1xf32> to vector<32x128xf32>
    %247 = arith.subf %241, %246 : vector<32x128xf32>
    %248 = arith.mulf %247, %247 : vector<32x128xf32>
    %cst_84 = arith.constant dense<0.000000e+00> : vector<32xf32>
    %249 = vector.multi_reduction <add>, %248, %cst_84 [1] : vector<32x128xf32> to vector<32xf32>
    %250 = vector.shape_cast %249 : vector<32xf32> to vector<32x1xf32>
    %cst_85 = arith.constant 1.280000e+02 : f32
    %251 = vector.broadcast %cst_85 : f32 to vector<32x1xf32>
    %252 = arith.divf %250, %251 : vector<32x1xf32>
    %253 = vector.broadcast %245 : vector<32x1xf32> to vector<32x128xf32>
    %254 = arith.subf %241, %253 : vector<32x128xf32>
    %cst_86 = arith.constant 9.99999997E-7 : f32
    %255 = vector.broadcast %cst_86 : f32 to vector<32x1xf32>
    %256 = arith.addf %252, %255 : vector<32x1xf32>
    %257 = math.rsqrt %256 : vector<32x1xf32>
    %258 = vector.broadcast %257 : vector<32x1xf32> to vector<32x128xf32>
    %259 = arith.mulf %254, %258 : vector<32x128xf32>
    %260 = vector.broadcast %5 : vector<1x128xf32> to vector<32x128xf32>
    %261 = arith.mulf %259, %260 : vector<32x128xf32>
    %262 = vector.broadcast %6 : vector<1x128xf32> to vector<32x128xf32>
    %263 = arith.addf %261, %262 : vector<32x128xf32>
    %264 = arith.truncf %263 : vector<32x128xf32> to vector<32x128xbf16>
    %c0_87 = arith.constant 0 : index
    %c0_88 = arith.constant 0 : index
    %265 = vector.load %arg4[%c0_87, %c0_88] : memref<128x512xbf16, #tpu.memory_space<vmem>>, vector<128x512xbf16>
    %cst_89 = arith.constant dense<0.000000e+00> : vector<32x512xf32>
    %266 = tpu.matmul %264, %265, %cst_89 {dimension_numbers = #tpu.dot_dimension_numbers<[1], [0], [0], [1], [0, 0, 1, 1], [], []>} : vector<32x128xbf16>, vector<128x512xbf16>, vector<32x512xf32> -> vector<32x512xf32>
    %c0_90 = arith.constant 0 : index
    %c0_91 = arith.constant 0 : index
    %267 = vector.load %arg5[%c0_90, %c0_91] : memref<1x512xf32, #tpu.memory_space<vmem>>, vector<1x512xf32>
    %268 = vector.broadcast %267 : vector<1x512xf32> to vector<32x512xf32>
    %269 = arith.addf %266, %268 : vector<32x512xf32>
    %270 = arith.mulf %269, %269 : vector<32x512xf32>
    %271 = arith.mulf %269, %270 : vector<32x512xf32>
    %cst_92 = arith.constant 4.471500e-02 : f32
    %272 = vector.broadcast %cst_92 : f32 to vector<32x512xf32>
    %273 = arith.mulf %272, %271 : vector<32x512xf32>
    %274 = arith.addf %269, %273 : vector<32x512xf32>
    %cst_93 = arith.constant 0.797884583 : f32
    %275 = vector.broadcast %cst_93 : f32 to vector<32x512xf32>
    %276 = arith.mulf %275, %274 : vector<32x512xf32>
    %277 = math.tanh %276 : vector<32x512xf32>
    %cst_94 = arith.constant 1.000000e+00 : f32
    %278 = vector.broadcast %cst_94 : f32 to vector<32x512xf32>
    %279 = arith.addf %278, %277 : vector<32x512xf32>
    %cst_95 = arith.constant 5.000000e-01 : f32
    %280 = vector.broadcast %cst_95 : f32 to vector<32x512xf32>
    %281 = arith.mulf %280, %279 : vector<32x512xf32>
    %282 = arith.mulf %269, %281 : vector<32x512xf32>
    %283 = arith.truncf %282 : vector<32x512xf32> to vector<32x512xbf16>
    %c0_96 = arith.constant 0 : index
    %c0_97 = arith.constant 0 : index
    %284 = vector.load %arg6[%c0_96, %c0_97] : memref<512x128xbf16, #tpu.memory_space<vmem>>, vector<512x128xbf16>
    %cst_98 = arith.constant dense<0.000000e+00> : vector<32x128xf32>
    %285 = tpu.matmul %283, %284, %cst_98 {dimension_numbers = #tpu.dot_dimension_numbers<[1], [0], [0], [1], [0, 0, 1, 1], [], []>} : vector<32x512xbf16>, vector<512x128xbf16>, vector<32x128xf32> -> vector<32x128xf32>
    %286 = vector.broadcast %7 : vector<1x128xf32> to vector<32x128xf32>
    %287 = arith.addf %285, %286 : vector<32x128xf32>
    %288 = vector.broadcast %8 : vector<1x128xf32> to vector<32x128xf32>
    %289 = arith.mulf %288, %287 : vector<32x128xf32>
    %290 = arith.addf %37, %289 : vector<32x128xf32>
    %291 = vector.shape_cast %290 : vector<32x128xf32> to vector<2x16x128xf32>
    %cst_99 = arith.constant dense<0.000000e+00> : vector<2x128xf32>
    %292 = vector.multi_reduction <add>, %291, %cst_99 [1] : vector<2x16x128xf32> to vector<2x128xf32>
    %cst_100 = arith.constant 1.600000e+01 : f32
    %293 = vector.broadcast %cst_100 : f32 to vector<2x128xf32>
    %294 = arith.divf %292, %293 : vector<2x128xf32>
    %cst_101 = arith.constant 0.000000e+00 : f32
    %295 = vector.broadcast %cst_101 : f32 to vector<6x128xf32>
    %296 = tpu.concatenate %294, %295 in 0 : vector<2x128xf32>, vector<6x128xf32> -> vector<8x128xf32>
    %cst_102 = arith.constant dense<0.000000e+00> : vector<8xf32>
    %297 = vector.multi_reduction <add>, %296, %cst_102 [1] : vector<8x128xf32> to vector<8xf32>
    %298 = vector.shape_cast %297 : vector<8xf32> to vector<8x1xf32>
    %cst_103 = arith.constant 1.280000e+02 : f32
    %299 = vector.broadcast %cst_103 : f32 to vector<8x1xf32>
    %300 = arith.divf %298, %299 : vector<8x1xf32>
    %301 = vector.broadcast %300 : vector<8x1xf32> to vector<8x128xf32>
    %302 = arith.subf %296, %301 : vector<8x128xf32>
    %303 = arith.mulf %302, %302 : vector<8x128xf32>
    %cst_104 = arith.constant dense<0.000000e+00> : vector<8xf32>
    %304 = vector.multi_reduction <add>, %303, %cst_104 [1] : vector<8x128xf32> to vector<8xf32>
    %305 = vector.shape_cast %304 : vector<8xf32> to vector<8x1xf32>
    %cst_105 = arith.constant 1.280000e+02 : f32
    %306 = vector.broadcast %cst_105 : f32 to vector<8x1xf32>
    %307 = arith.divf %305, %306 : vector<8x1xf32>
    %308 = vector.broadcast %300 : vector<8x1xf32> to vector<8x128xf32>
    %309 = arith.subf %296, %308 : vector<8x128xf32>
    %cst_106 = arith.constant 9.99999997E-7 : f32
    %310 = vector.broadcast %cst_106 : f32 to vector<8x1xf32>
    %311 = arith.addf %307, %310 : vector<8x1xf32>
    %312 = math.rsqrt %311 : vector<8x1xf32>
    %313 = vector.broadcast %312 : vector<8x1xf32> to vector<8x128xf32>
    %314 = arith.mulf %309, %313 : vector<8x128xf32>
    %315 = vector.broadcast %9 : vector<1x128xf32> to vector<8x128xf32>
    %316 = arith.mulf %314, %315 : vector<8x128xf32>
    %317 = vector.broadcast %10 : vector<1x128xf32> to vector<8x128xf32>
    %318 = arith.addf %316, %317 : vector<8x128xf32>
    %319 = arith.truncf %318 : vector<8x128xf32> to vector<8x128xbf16>
    %c0_107 = arith.constant 0 : index
    %c0_108 = arith.constant 0 : index
    %320 = vector.load %arg7[%c0_107, %c0_108] : memref<128x128xbf16, #tpu.memory_space<vmem>>, vector<128x128xbf16>
    %cst_109 = arith.constant dense<0.000000e+00> : vector<8x128xf32>
    %321 = tpu.matmul %319, %320, %cst_109 {dimension_numbers = #tpu.dot_dimension_numbers<[1], [0], [0], [1], [0, 0, 1, 1], [], []>} : vector<8x128xbf16>, vector<128x128xbf16>, vector<8x128xf32> -> vector<8x128xf32>
    %c0_110 = arith.constant 0 : index
    %c0_111 = arith.constant 0 : index
    %322 = vector.load %arg8[%c0_110, %c0_111] : memref<1x128xf32, #tpu.memory_space<vmem>>, vector<1x128xf32>
    %323 = vector.broadcast %322 : vector<1x128xf32> to vector<8x128xf32>
    %324 = arith.addf %321, %323 : vector<8x128xf32>
    %c0_112 = arith.constant 0 : index
    %c0_113 = arith.constant 0 : index
    %325 = vector.load %arg9[%c0_112, %c0_113] : memref<8x128xf32, #tpu.memory_space<vmem>>, vector<8x128xf32>
    tpu.vector_store %arg9[%c0_112, %c0_113], %324 {strides = array<i32>} : memref<8x128xf32, #tpu.memory_space<vmem>>, vector<8x128xf32>,
    return
  }
}

</mosaic_0001>

<llo_original>
// kernel: forward.1
$region0: #{forward.1}
  #allocation0 [shape = 'u32[]', space=smem, size = 0x4, offset = 0x4, fixed_abs, tag = 'smem constant byte address 0x4 - core index']
  #allocation1 [shape = 'u32[144,128]{1,0:T(1,128)}', space=vmem, size = 0x12000, scoped, tag = 'internal scratch']
  %s0 = inlined_call_operand.vmem [shape: bf16[32,128], index: 0, kind: input, shape index: {}]
  %s1 = inlined_call_operand.vmem [shape: bf16[128,128], index: 1, kind: input, shape index: {}]
  %s2 = inlined_call_operand.vmem [shape: f32[16,128], index: 2, kind: input, shape index: {}]
  %s3 = inlined_call_operand.vmem [shape: f32[1568,128], index: 3, kind: input, shape index: {}]
  %s4 = inlined_call_operand.vmem [shape: bf16[128,512], index: 4, kind: input, shape index: {}]
  %s5 = inlined_call_operand.vmem [shape: f32[1,512], index: 5, kind: input, shape index: {}]
  %s6 = inlined_call_operand.vmem [shape: bf16[512,128], index: 6, kind: input, shape index: {}]
  %s7 = inlined_call_operand.vmem [shape: bf16[128,128], index: 7, kind: input, shape index: {}]
  %s8 = inlined_call_operand.vmem [shape: f32[1,128], index: 8, kind: input, shape index: {}]
  %s9 = inlined_call_operand.vmem [shape: f32[8,128], index: 9, kind: output, shape index: {}]
  %s10 = sld [smem:[#allocation0]]
  $region46: #{forward.1} parent=0
    _
  %s12 = ssub.s32 1, %s10
  %s13 = scalar_select 0, %s12, %s10
  // Predicated region
  $region2: #{forward.1} parent=0 // pred_check
    _
  $region3: #{forward.1} parent=0 // pred_check_branch
    %15 = sbr.rel (0) target = $region5
  $region4: #{forward.1} parent=0 // pred_region
    _
  $region5: #{forward.1} parent=0 // pred_fallthru
    _
  // Predicated region
  $region6: #{forward.1} parent=0 // pred_check
    _
  $region7: #{forward.1} parent=0 // pred_check_branch
    %17 = sbr.rel (0) target = $region9
  $region8: #{forward.1} parent=0 // pred_region
    _
  $region9: #{forward.1} parent=0 // pred_fallthru
    _
  // Predicated region
  $region10: #{forward.1} parent=0 // pred_check
    _
  $region11: #{forward.1} parent=0 // pred_check_branch
    %19 = sbr.rel (0) target = $region13
  $region12: #{forward.1} parent=0 // pred_region
    _
  $region13: #{forward.1} parent=0 // pred_fallthru
    _
  // Predicated region
  $region14: #{forward.1} parent=0 // pred_check
    _
  $region15: #{forward.1} parent=0 // pred_check_branch
    %21 = sbr.rel (0) target = $region17
  $region16: #{forward.1} parent=0 // pred_region
    _
  $region17: #{forward.1} parent=0 // pred_fallthru
    _
  // Predicated region
  $region18: #{forward.1} parent=0 // pred_check
    _
  $region19: #{forward.1} parent=0 // pred_check_branch
    %23 = sbr.rel (0) target = $region21
  $region20: #{forward.1} parent=0 // pred_region
    _
  $region21: #{forward.1} parent=0 // pred_fallthru
    _
  // Predicated region
  $region22: #{forward.1} parent=0 // pred_check
    _
  $region23: #{forward.1} parent=0 // pred_check_branch
    %25 = sbr.rel (0) target = $region25
  $region24: #{forward.1} parent=0 // pred_region
    _
  $region25: #{forward.1} parent=0 // pred_fallthru
    _
  // Predicated region
  $region26: #{forward.1} parent=0 // pred_check
    _
  $region27: #{forward.1} parent=0 // pred_check_branch
    %27 = sbr.rel (0) target = $region29
  $region28: #{forward.1} parent=0 // pred_region
    _
  $region29: #{forward.1} parent=0 // pred_fallthru
    _
  // Predicated region
  $region30: #{forward.1} parent=0 // pred_check
    _
  $region31: #{forward.1} parent=0 // pred_check_branch
    %29 = sbr.rel (0) target = $region33
  $region32: #{forward.1} parent=0 // pred_region
    _
  $region33: #{forward.1} parent=0 // pred_fallthru
    _
  // Predicated region
  $region34: #{forward.1} parent=0 // pred_check
    _
  $region35: #{forward.1} parent=0 // pred_check_branch
    %31 = sbr.rel (0) target = $region37
  $region36: #{forward.1} parent=0 // pred_region
    _
  $region37: #{forward.1} parent=0 // pred_fallthru
    _
  %v33 = vld [vmem:[%s2] sm:$0xff]
  %v34 = vld [vmem:[%s2 + $0x8] sm:$0xff]
  %v35 = vld [vmem:[%s0] sm:$0xf]
  %v36 = vld [vmem:[%s0 + $0x4] sm:$0xf]
  %v37 = vld [vmem:[%s0 + $0x8] sm:$0xf]
  %v38 = vld [vmem:[%s0 + $0xc] sm:$0xf]
  %v39 = vld [vmem:[%s1] sm:$0xf]
  %v40 = vld [vmem:[%s1 + $0x4] sm:$0xf]
  %v41 = vld [vmem:[%s1 + $0x8] sm:$0xf]
  %v42 = vld [vmem:[%s1 + $0xc] sm:$0xf]
  %v43 = vld [vmem:[%s1 + $0x10] sm:$0xf]
  %v44 = vld [vmem:[%s1 + $0x14] sm:$0xf]
  %v45 = vld [vmem:[%s1 + $0x18] sm:$0xf]
  %v46 = vld [vmem:[%s1 + $0x1c] sm:$0xf]
  %v47 = vld [vmem:[%s1 + $0x20] sm:$0xf]
  %v48 = vld [vmem:[%s1 + $0x24] sm:$0xf]
  %v49 = vld [vmem:[%s1 + $0x28] sm:$0xf]
  %v50 = vld [vmem:[%s1 + $0x2c] sm:$0xf]
  %v51 = vld [vmem:[%s1 + $0x30] sm:$0xf]
  %v52 = vld [vmem:[%s1 + $0x34] sm:$0xf]
  %v53 = vld [vmem:[%s1 + $0x38] sm:$0xf]
  %v54 = vld [vmem:[%s1 + $0x3c] sm:$0xf]
  %v55 = vlaneseq
  %v56 = vshrl.u32 %v55, 7
  %v57 = vsub.s32 0, %v56
  %v58 = vrot.slane %v33, %v57
  %v63 = vunpack.c.l.b16 %v35
  %v64 = vunpack.c.l.b16 %v36
  %v65 = vunpack.c.l.b16 %v37
  %v66 = vunpack.c.l.b16 %v38
  %v67 = vpack.c.b16 %v64, %v63
  %v68 = vpack.c.b16 %v66, %v65
  %v87 = vunpack.c.l.b16 %v39
  %v88 = vunpack.c.l.b16 %v40
  %v89 = vunpack.c.l.b16 %v41
  %v90 = vunpack.c.l.b16 %v42
  %v91 = vunpack.c.l.b16 %v43
  %v92 = vunpack.c.l.b16 %v44
  %v93 = vunpack.c.l.b16 %v45
  %v94 = vunpack.c.l.b16 %v46
  %v95 = vunpack.c.l.b16 %v47
  %v96 = vunpack.c.l.b16 %v48
  %v97 = vunpack.c.l.b16 %v49
  %v98 = vunpack.c.l.b16 %v50
  %v99 = vunpack.c.l.b16 %v51
  %v100 = vunpack.c.l.b16 %v52
  %v101 = vunpack.c.l.b16 %v53
  %v102 = vunpack.c.l.b16 %v54
  %v103 = vpack.c.b16 %v88, %v87
  %v104 = vpack.c.b16 %v90, %v89
  %v105 = vpack.c.b16 %v92, %v91
  %v106 = vpack.c.b16 %v94, %v93
  %v107 = vpack.c.b16 %v96, %v95
  %v108 = vpack.c.b16 %v98, %v97
  %v109 = vpack.c.b16 %v100, %v99
  %v110 = vpack.c.b16 %v102, %v101
  %119 = vmatprep.subr.bf16.mxu0 0
  %120 = vmatpush1.bf16.msra.mxu0 %v103
  %121 = vmatprep.subr.bf16.mxu0 0
  %122 = vmatpush1.bf16.msra.mxu0 %v104
  %123 = vmatprep.subr.bf16.mxu0 0
  %124 = vmatpush1.bf16.msra.mxu0 %v105
  %125 = vmatprep.subr.bf16.mxu0 0
  %126 = vmatpush1.bf16.msra.mxu0 %v106
  %127 = vmatprep.subr.bf16.mxu0 0
  %128 = vmatpush1.bf16.msra.mxu0 %v107
  %129 = vmatprep.subr.bf16.mxu0 0
  %130 = vmatpush1.bf16.msra.mxu0 %v108
  %131 = vmatprep.subr.bf16.mxu0 0
  %132 = vmatpush1.bf16.msra.mxu0 %v109
  %133 = vmatprep.subr.bf16.mxu0 0
  %134 = vmatpush1.bf16.msra.mxu0 %v110
  %135 = vmatprep.subr.bf16.mxu0 0
  %136 = vmatpush1.bf16.msra.mxu0 0
  %137 = vmatprep.subr.bf16.mxu0 0
  %138 = vmatpush1.bf16.msra.mxu0 0
  %139 = vmatprep.subr.bf16.mxu0 0
  %140 = vmatpush1.bf16.msra.mxu0 0
  %141 = vmatprep.subr.bf16.mxu0 0
  %142 = vmatpush1.bf16.msra.mxu0 0
  %143 = vmatprep.subr.bf16.mxu0 0
  %144 = vmatpush1.bf16.msra.mxu0 0
  %145 = vmatprep.subr.bf16.mxu0 0
  %146 = vmatpush1.bf16.msra.mxu0 0
  %147 = vmatprep.subr.bf16.mxu0 0
  %148 = vmatpush1.bf16.msra.mxu0 0
  %149 = vmatprep.subr.bf16.mxu0 0
  %150 = vmatpush1.bf16.msra.mxu0 0
  %151 = vmatprep.mubr.bf16.mxu0 0
  %152 = vmatmul.mubr.bf16.gmra.mrb[0].mxu0 %v67
  %v153 = vpop.f32.mrb[0].mxu0
  %v154 = vadd.f32 %v58, %v153
  %v155 = vpop.f32.mrb[0].mxu0
  %v156 = vpop.f32.mrb[0].mxu0
  %v157 = vadd.f32 %v58, %v156
  %v158 = vpop.f32.mrb[0].mxu0
  %159 = vmatprep.mubr.bf16.mxu0 0
  %160 = vmatmul.mubr.bf16.gmra.mrb[0].mxu0 %v68
  %v161 = vpop.f32.mrb[0].mxu0
  %v162 = vadd.f32 %v58, %v161
  %v163 = vpop.f32.mrb[0].mxu0
  %v164 = vpop.f32.mrb[0].mxu0
  %v165 = vadd.f32 %v58, %v164
  %v166 = vpop.f32.mrb[0].mxu0
  %167 = vdwg.mxu0
  %168 = vadd.xlane.f32.xlu0 %v154
  %v169 = vpop.xlane.xlu0 %168
  %170 = vadd.xlane.f32.xlu0 %v157
  %v171 = vpop.xlane.xlu0 %170
  %172 = vadd.xlane.f32.xlu0 %v162
  %v173 = vpop.xlane.xlu0 %172
  %174 = vadd.xlane.f32.xlu0 %v165
  %v175 = vpop.xlane.xlu0 %174
  %v176 = vrcp.pop 128.0
  %v177 = vmul.f32 %v169, %v176
  %v178 = vmul.f32 %v171, %v176
  %v179 = vmul.f32 %v173, %v176
  %v180 = vmul.f32 %v175, %v176
  %v181 = vsub.f32 %v154, %v177
  %v182 = vsub.f32 %v157, %v178
  %v183 = vsub.f32 %v162, %v179
  %v184 = vsub.f32 %v165, %v180
  %v185 = vmul.f32 %v181, %v181
  %v186 = vmul.f32 %v182, %v182
  %v187 = vmul.f32 %v183, %v183
  %v188 = vmul.f32 %v184, %v184
  %189 = vadd.xlane.f32.xlu0 %v185
  %v190 = vpop.xlane.xlu0 %189
  %191 = vadd.xlane.f32.xlu0 %v186
  %v192 = vpop.xlane.xlu0 %191
  %193 = vadd.xlane.f32.xlu0 %v187
  %v194 = vpop.xlane.xlu0 %193
  %195 = vadd.xlane.f32.xlu0 %v188
  %v196 = vpop.xlane.xlu0 %195
  %v197 = vmul.f32 %v190, %v176
  %v198 = vmul.f32 %v192, %v176
  %v199 = vmul.f32 %v194, %v176
  %v200 = vmul.f32 %v196, %v176
  %v201 = vadd.f32 %v197, 1e-06
  %v202 = vadd.f32 %v198, 1e-06
  %v203 = vadd.f32 %v199, 1e-06
  %v204 = vadd.f32 %v200, 1e-06
  %v205 = vrsqrt.pop %v201
  %v206 = vrsqrt.pop %v202
  %v207 = vrsqrt.pop %v203
  %v208 = vrsqrt.pop %v204
  %v209 = vmul.f32 %v181, %v205
  %v210 = vmul.f32 %v182, %v206
  %v211 = vmul.f32 %v183, %v207
  %v212 = vmul.f32 %v184, %v208
  %v213 = vlaneseq
  %v214 = vshrl.u32 %v213, 7
  %v215 = vsub.s32 1, %v214
  %v216 = vrot.slane %v33, %v215
  %v217 = vmul.f32 %v209, %v216
  %v218 = vmul.f32 %v210, %v216
  %v219 = vmul.f32 %v211, %v216
  %v220 = vmul.f32 %v212, %v216
  %v221 = vlaneseq
  %v222 = vshrl.u32 %v221, 7
  %v223 = vsub.s32 2, %v222
  %v224 = vrot.slane %v33, %v223
  %v225 = vadd.f32 %v217, %v224
  %v226 = vadd.f32 %v218, %v224
  %v227 = vadd.f32 %v219, %v224
  %v228 = vadd.f32 %v220, %v224
  %v229 = vrot.slane %v225, 1
  %v230 = vrot.slane %v226, 1
  %v231 = vrot.slane %v227, 1
  %v232 = vrot.slane %v228, 1
  %v233 = vlaneseq
  %v234 = vshrl.u32 %v233, 7
  %vm235 = vcmp.lt.s32.totalorder %v234, 7
  %v236 = vsel %vm235, %v231, %v232
  %v237 = vsel %vm235, %v230, %v231
  %v238 = vsel %vm235, %v229, %v230
  %v239 = vsel %vm235, %v232, %v229
  %v240 = vld [vmem:[%s3] sm:$0xff]
  %v241 = vld [vmem:[%s3 + $0x8] sm:$0xff]
  %v242 = vld [vmem:[%s3 + $0x10] sm:$0xff]
  %v243 = vld [vmem:[%s3 + $0x18] sm:$0xff]
  %v244 = vmul.f32 %v236, %v240
  %v245 = vmul.f32 %v239, %v241
  %v246 = vmul.f32 %v238, %v242
  %v247 = vmul.f32 %v237, %v243
  %v248 = vadd.f32 %v244, 0.0
  %v249 = vadd.f32 %v245, 0.0
  %v250 = vadd.f32 %v246, 0.0
  %v251 = vadd.f32 %v247, 0.0
  %v252 = vrot.slane %v225, 2
  %v253 = vrot.slane %v226, 2
  %v254 = vrot.slane %v227, 2
  %v255 = vrot.slane %v228, 2
  %vm256 = vcmp.lt.s32.totalorder %v234, 6
  %v257 = vsel %vm256, %v254, %v255
  %v258 = vsel %vm256, %v253, %v254
  %v259 = vsel %vm256, %v252, %v253
  %v260 = vsel %vm256, %v255, %v252
  %v261 = vld [vmem:[%s3 + $0x20] sm:$0xff]
  %v262 = vld [vmem:[%s3 + $0x28] sm:$0xff]
  %v263 = vld [vmem:[%s3 + $0x30] sm:$0xff]
  %v264 = vld [vmem:[%s3 + $0x38] sm:$0xff]
  %v265 = vmul.f32 %v257, %v261
  %v266 = vmul.f32 %v260, %v262
  %v267 = vmul.f32 %v259, %v263
  %v268 = vmul.f32 %v258, %v264
  %v269 = vadd.f32 %v265, 0.0
  %v270 = vadd.f32 %v266, 0.0
  %v271 = vadd.f32 %v267, 0.0
  %v272 = vadd.f32 %v268, 0.0
  %v273 = vrot.slane %v225, 3
  %v274 = vrot.slane %v226, 3
  %v275 = vrot.slane %v227, 3
  %v276 = vrot.slane %v228, 3
  %vm277 = vcmp.lt.s32.totalorder %v234, 5
  %v278 = vsel %vm277, %v275, %v276
  %v279 = vsel %vm277, %v274, %v275
  %v280 = vsel %vm277, %v273, %v274
  %v281 = vsel %vm277, %v276, %v273
  %v282 = vld [vmem:[%s3 + $0x40] sm:$0xff]
  %v283 = vld [vmem:[%s3 + $0x48] sm:$0xff]
  %v284 = vld [vmem:[%s3 + $0x50] sm:$0xff]
  %v285 = vld [vmem:[%s3 + $0x58] sm:$0xff]
  %v286 = vmul.f32 %v278, %v282
  %v287 = vmul.f32 %v281, %v283
  %v288 = vmul.f32 %v280, %v284
  %v289 = vmul.f32 %v279, %v285
  %v290 = vadd.f32 %v286, 0.0
  %v291 = vadd.f32 %v287, 0.0
  %v292 = vadd.f32 %v288, 0.0
  %v293 = vadd.f32 %v289, 0.0
  %v294 = vrot.slane %v225, 4
  %v295 = vrot.slane %v226, 4
  %v296 = vrot.slane %v227, 4
  %v297 = vrot.slane %v228, 4
  %vm298 = vcmp.lt.s32.totalorder %v234, 4
  %v299 = vsel %vm298, %v296, %v297
  %v300 = vsel %vm298, %v295, %v296
  %v301 = vsel %vm298, %v294, %v295
  %v302 = vsel %vm298, %v297, %v294
  %v303 = vld [vmem:[%s3 + $0x60] sm:$0xff]
  %v304 = vld [vmem:[%s3 + $0x68] sm:$0xff]
  %v305 = vld [vmem:[%s3 + $0x70] sm:$0xff]
  %v306 = vld [vmem:[%s3 + $0x78] sm:$0xff]
  %v307 = vmul.f32 %v299, %v303
  %v308 = vmul.f32 %v302, %v304
  %v309 = vmul.f32 %v301, %v305
  %v310 = vmul.f32 %v300, %v306
  %v311 = vadd.f32 %v307, 0.0
  %v312 = vadd.f32 %v308, 0.0
  %v313 = vadd.f32 %v309, 0.0
  %v314 = vadd.f32 %v310, 0.0
  %v315 = vrot.slane %v225, 5
  %v316 = vrot.slane %v226, 5
  %v317 = vrot.slane %v227, 5
  %v318 = vrot.slane %v228, 5
  %vm319 = vcmp.lt.s32.totalorder %v234, 3
  %v320 = vsel %vm319, %v317, %v318
  %v321 = vsel %vm319, %v316, %v317
  %v322 = vsel %vm319, %v315, %v316
  %v323 = vsel %vm319, %v318, %v315
  %v324 = vld [vmem:[%s3 + $0x80] sm:$0xff]
  %v325 = vld [vmem:[%s3 + $0x88] sm:$0xff]
  %v326 = vld [vmem:[%s3 + $0x90] sm:$0xff]
  %v327 = vld [vmem:[%s3 + $0x98] sm:$0xff]
  %v328 = vmul.f32 %v320, %v324
  %v329 = vmul.f32 %v323, %v325
  %v330 = vmul.f32 %v322, %v326
  %v331 = vmul.f32 %v321, %v327
  %v332 = vadd.f32 %v248, %v328
  %v333 = vadd.f32 %v249, %v329
  %v334 = vadd.f32 %v250, %v330
  %v335 = vadd.f32 %v251, %v331
  %v336 = vrot.slane %v225, 6
  %v337 = vrot.slane %v226, 6
  %v338 = vrot.slane %v227, 6
  %v339 = vrot.slane %v228, 6
  %vm340 = vcmp.lt.s32.totalorder %v234, 2
  %v341 = vsel %vm340, %v338, %v339
  %v342 = vsel %vm340, %v337, %v338
  %v343 = vsel %vm340, %v336, %v337
  %v344 = vsel %vm340, %v339, %v336
  %v345 = vld [vmem:[%s3 + $0xa0] sm:$0xff]
  %v346 = vld [vmem:[%s3 + $0xa8] sm:$0xff]
  %v347 = vld [vmem:[%s3 + $0xb0] sm:$0xff]
  %v348 = vld [vmem:[%s3 + $0xb8] sm:$0xff]
  %v349 = vmul.f32 %v341, %v345
  %v350 = vmul.f32 %v344, %v346
  %v351 = vmul.f32 %v343, %v347
  %v352 = vmul.f32 %v342, %v348
  %v353 = vadd.f32 %v269, %v349
  %v354 = vadd.f32 %v270, %v350
  %v355 = vadd.f32 %v271, %v351
  %v356 = vadd.f32 %v272, %v352
  %v357 = vrot.slane %v225, 7
  %v358 = vrot.slane %v226, 7
  %v359 = vrot.slane %v227, 7
  %v360 = vrot.slane %v228, 7
  %vm361 = vcmp.lt.s32.totalorder %v234, 1
  %v362 = vsel %vm361, %v359, %v360
  %v363 = vsel %vm361, %v358, %v359
  %v364 = vsel %vm361, %v357, %v358
  %v365 = vsel %vm361, %v360, %v357
  %v366 = vld [vmem:[%s3 + $0xc0] sm:$0xff]
  %v367 = vld [vmem:[%s3 + $0xc8] sm:$0xff]
  %v368 = vld [vmem:[%s3 + $0xd0] sm:$0xff]
  %v369 = vld [vmem:[%s3 + $0xd8] sm:$0xff]
  %v370 = vmul.f32 %v362, %v366
  %v371 = vmul.f32 %v365, %v367
  %v372 = vmul.f32 %v364, %v368
  %v373 = vmul.f32 %v363, %v369
  %v374 = vadd.f32 %v290, %v370
  %v375 = vadd.f32 %v291, %v371
  %v376 = vadd.f32 %v292, %v372
  %v377 = vadd.f32 %v293, %v373
  %v378 = vld [vmem:[%s3 + $0xe0] sm:$0xff]
  %v379 = vld [vmem:[%s3 + $0xe8] sm:$0xff]
  %v380 = vld [vmem:[%s3 + $0xf0] sm:$0xff]
  %v381 = vld [vmem:[%s3 + $0xf8] sm:$0xff]
  %v382 = vmul.f32 %v320, %v378
  %v383 = vmul.f32 %v323, %v379
  %v384 = vmul.f32 %v322, %v380
  %v385 = vmul.f32 %v321, %v381
  %v386 = vadd.f32 %v311, %v382
  %v387 = vadd.f32 %v312, %v383
  %v388 = vadd.f32 %v313, %v384
  %v389 = vadd.f32 %v314, %v385
  %v390 = vld [vmem:[%s3 + $0x100] sm:$0xff]
  %v391 = vld [vmem:[%s3 + $0x108] sm:$0xff]
  %v392 = vld [vmem:[%s3 + $0x110] sm:$0xff]
  %v393 = vld [vmem:[%s3 + $0x118] sm:$0xff]
  %v394 = vmul.f32 %v341, %v390
  %v395 = vmul.f32 %v344, %v391
  %v396 = vmul.f32 %v343, %v392
  %v397 = vmul.f32 %v342, %v393
  %v398 = vadd.f32 %v332, %v394
  %v399 = vadd.f32 %v333, %v395
  %v400 = vadd.f32 %v334, %v396
  %v401 = vadd.f32 %v335, %v397
  %v402 = vld [vmem:[%s3 + $0x120] sm:$0xff]
  %v403 = vld [vmem:[%s3 + $0x128] sm:$0xff]
  %v404 = vld [vmem:[%s3 + $0x130] sm:$0xff]
  %v405 = vld [vmem:[%s3 + $0x138] sm:$0xff]
  %v406 = vmul.f32 %v362, %v402
  %v407 = vmul.f32 %v365, %v403
  %v408 = vmul.f32 %v364, %v404
  %v409 = vmul.f32 %v363, %v405
  %v410 = vadd.f32 %v353, %v406
  %v411 = vadd.f32 %v354, %v407
  %v412 = vadd.f32 %v355, %v408
  %v413 = vadd.f32 %v356, %v409
  %v414 = vld [vmem:[%s3 + $0x140] sm:$0xff]
  %v415 = vld [vmem:[%s3 + $0x148] sm:$0xff]
  %v416 = vld [vmem:[%s3 + $0x150] sm:$0xff]
  %v417 = vld [vmem:[%s3 + $0x158] sm:$0xff]
  %v418 = vmul.f32 %v228, %v414
  %v419 = vmul.f32 %v225, %v415
  %v420 = vmul.f32 %v226, %v416
  %v421 = vmul.f32 %v227, %v417
  %v422 = vadd.f32 %v374, %v418
  %v423 = vadd.f32 %v375, %v419
  %v424 = vadd.f32 %v376, %v420
  %v425 = vadd.f32 %v377, %v421
  %v426 = vld [vmem:[%s3 + $0x160] sm:$0xff]
  %v427 = vld [vmem:[%s3 + $0x168] sm:$0xff]
  %v428 = vld [vmem:[%s3 + $0x170] sm:$0xff]
  %v429 = vld [vmem:[%s3 + $0x178] sm:$0xff]
  %v430 = vmul.f32 %v239, %v426
  %v431 = vmul.f32 %v238, %v427
  %v432 = vmul.f32 %v237, %v428
  %v433 = vmul.f32 %v236, %v429
  %v434 = vadd.f32 %v386, %v430
  %v435 = vadd.f32 %v387, %v431
  %v436 = vadd.f32 %v388, %v432
  %v437 = vadd.f32 %v389, %v433
  %v438 = vld [vmem:[%s3 + $0x180] sm:$0xff]
  %v439 = vld [vmem:[%s3 + $0x188] sm:$0xff]
  %v440 = vld [vmem:[%s3 + $0x190] sm:$0xff]
  %v441 = vld [vmem:[%s3 + $0x198] sm:$0xff]
  %v442 = vmul.f32 %v260, %v438
  %v443 = vmul.f32 %v259, %v439
  %v444 = vmul.f32 %v258, %v440
  %v445 = vmul.f32 %v257, %v441
  %v446 = vadd.f32 %v398, %v442
  %v447 = vadd.f32 %v399, %v443
  %v448 = vadd.f32 %v400, %v444
  %v449 = vadd.f32 %v401, %v445
  %v450 = vld [vmem:[%s3 + $0x1a0] sm:$0xff]
  %v451 = vld [vmem:[%s3 + $0x1a8] sm:$0xff]
  %v452 = vld [vmem:[%s3 + $0x1b0] sm:$0xff]
  %v453 = vld [vmem:[%s3 + $0x1b8] sm:$0xff]
  %v454 = vmul.f32 %v281, %v450
  %v455 = vmul.f32 %v280, %v451
  %v456 = vmul.f32 %v279, %v452
  %v457 = vmul.f32 %v278, %v453
  %v458 = vadd.f32 %v410, %v454
  %v459 = vadd.f32 %v411, %v455
  %v460 = vadd.f32 %v412, %v456
  %v461 = vadd.f32 %v413, %v457
  %v462 = vld [vmem:[%s3 + $0x1c0] sm:$0xff]
  %v463 = vld [vmem:[%s3 + $0x1c8] sm:$0xff]
  %v464 = vld [vmem:[%s3 + $0x1d0] sm:$0xff]
  %v465 = vld [vmem:[%s3 + $0x1d8] sm:$0xff]
  %v466 = vmul.f32 %v239, %v462
  %v467 = vmul.f32 %v238, %v463
  %v468 = vmul.f32 %v237, %v464
  %v469 = vmul.f32 %v236, %v465
  %v470 = vadd.f32 %v422, %v466
  %v471 = vadd.f32 %v423, %v467
  %v472 = vadd.f32 %v424, %v468
  %v473 = vadd.f32 %v425, %v469
  %v474 = vld [vmem:[%s3 + $0x1e0] sm:$0xff]
  %v475 = vld [vmem:[%s3 + $0x1e8] sm:$0xff]
  %v476 = vld [vmem:[%s3 + $0x1f0] sm:$0xff]
  %v477 = vld [vmem:[%s3 + $0x1f8] sm:$0xff]
  %v478 = vmul.f32 %v260, %v474
  %v479 = vmul.f32 %v259, %v475
  %v480 = vmul.f32 %v258, %v476
  %v481 = vmul.f32 %v257, %v477
  %v482 = vadd.f32 %v434, %v478
  %v483 = vadd.f32 %v435, %v479
  %v484 = vadd.f32 %v436, %v480
  %v485 = vadd.f32 %v437, %v481
  %v486 = vld [vmem:[%s3 + $0x200] sm:$0xff]
  %v487 = vld [vmem:[%s3 + $0x208] sm:$0xff]
  %v488 = vld [vmem:[%s3 + $0x210] sm:$0xff]
  %v489 = vld [vmem:[%s3 + $0x218] sm:$0xff]
  %v490 = vmul.f32 %v281, %v486
  %v491 = vmul.f32 %v280, %v487
  %v492 = vmul.f32 %v279, %v488
  %v493 = vmul.f32 %v278, %v489
  %v494 = vadd.f32 %v446, %v490
  %v495 = vadd.f32 %v447, %v491
  %v496 = vadd.f32 %v448, %v492
  %v497 = vadd.f32 %v449, %v493
  %v498 = vld [vmem:[%s3 + $0x220] sm:$0xff]
  %v499 = vld [vmem:[%s3 + $0x228] sm:$0xff]
  %v500 = vld [vmem:[%s3 + $0x230] sm:$0xff]
  %v501 = vld [vmem:[%s3 + $0x238] sm:$0xff]
  %v502 = vmul.f32 %v302, %v498
  %v503 = vmul.f32 %v301, %v499
  %v504 = vmul.f32 %v300, %v500
  %v505 = vmul.f32 %v299, %v501
  %v506 = vadd.f32 %v458, %v502
  %v507 = vadd.f32 %v459, %v503
  %v508 = vadd.f32 %v460, %v504
  %v509 = vadd.f32 %v461, %v505
  %v510 = vld [vmem:[%s3 + $0x240] sm:$0xff]
  %v511 = vld [vmem:[%s3 + $0x248] sm:$0xff]
  %v512 = vld [vmem:[%s3 + $0x250] sm:$0xff]
  %v513 = vld [vmem:[%s3 + $0x258] sm:$0xff]
  %v514 = vmul.f32 %v323, %v510
  %v515 = vmul.f32 %v322, %v511
  %v516 = vmul.f32 %v321, %v512
  %v517 = vmul.f32 %v320, %v513
  %v518 = vadd.f32 %v470, %v514
  %v519 = vadd.f32 %v471, %v515
  %v520 = vadd.f32 %v472, %v516
  %v521 = vadd.f32 %v473, %v517
  %v522 = vld [vmem:[%s3 + $0x260] sm:$0xff]
  %v523 = vld [vmem:[%s3 + $0x268] sm:$0xff]
  %v524 = vld [vmem:[%s3 + $0x270] sm:$0xff]
  %v525 = vld [vmem:[%s3 + $0x278] sm:$0xff]
  %v526 = vmul.f32 %v344, %v522
  %v527 = vmul.f32 %v343, %v523
  %v528 = vmul.f32 %v342, %v524
  %v529 = vmul.f32 %v341, %v525
  %v530 = vadd.f32 %v482, %v526
  %v531 = vadd.f32 %v483, %v527
  %v532 = vadd.f32 %v484, %v528
  %v533 = vadd.f32 %v485, %v529
  %v534 = vld [vmem:[%s3 + $0x280] sm:$0xff]
  %v535 = vld [vmem:[%s3 + $0x288] sm:$0xff]
  %v536 = vld [vmem:[%s3 + $0x290] sm:$0xff]
  %v537 = vld [vmem:[%s3 + $0x298] sm:$0xff]
  %v538 = vmul.f32 %v365, %v534
  %v539 = vmul.f32 %v364, %v535
  %v540 = vmul.f32 %v363, %v536
  %v541 = vmul.f32 %v362, %v537
  %v542 = vadd.f32 %v494, %v538
  %v543 = vadd.f32 %v495, %v539
  %v544 = vadd.f32 %v496, %v540
  %v545 = vadd.f32 %v497, %v541
  %v546 = vld [vmem:[%s3 + $0x2a0] sm:$0xff]
  %v547 = vld [vmem:[%s3 + $0x2a8] sm:$0xff]
  %v548 = vld [vmem:[%s3 + $0x2b0] sm:$0xff]
  %v549 = vld [vmem:[%s3 + $0x2b8] sm:$0xff]
  %v550 = vmul.f32 %v323, %v546
  %v551 = vmul.f32 %v322, %v547
  %v552 = vmul.f32 %v321, %v548
  %v553 = vmul.f32 %v320, %v549
  %v554 = vadd.f32 %v506, %v550
  %v555 = vadd.f32 %v507, %v551
  %v556 = vadd.f32 %v508, %v552
  %v557 = vadd.f32 %v509, %v553
  %v558 = vld [vmem:[%s3 + $0x2c0] sm:$0xff]
  %v559 = vld [vmem:[%s3 + $0x2c8] sm:$0xff]
  %v560 = vld [vmem:[%s3 + $0x2d0] sm:$0xff]
  %v561 = vld [vmem:[%s3 + $0x2d8] sm:$0xff]
  %v562 = vmul.f32 %v344, %v558
  %v563 = vmul.f32 %v343, %v559
  %v564 = vmul.f32 %v342, %v560
  %v565 = vmul.f32 %v341, %v561
  %v566 = vadd.f32 %v518, %v562
  %v567 = vadd.f32 %v519, %v563
  %v568 = vadd.f32 %v520, %v564
  %v569 = vadd.f32 %v521, %v565
  %v570 = vld [vmem:[%s3 + $0x2e0] sm:$0xff]
  %v571 = vld [vmem:[%s3 + $0x2e8] sm:$0xff]
  %v572 = vld [vmem:[%s3 + $0x2f0] sm:$0xff]
  %v573 = vld [vmem:[%s3 + $0x2f8] sm:$0xff]
  %v574 = vmul.f32 %v365, %v570
  %v575 = vmul.f32 %v364, %v571
  %v576 = vmul.f32 %v363, %v572
  %v577 = vmul.f32 %v362, %v573
  %v578 = vadd.f32 %v530, %v574
  %v579 = vadd.f32 %v531, %v575
  %v580 = vadd.f32 %v532, %v576
  %v581 = vadd.f32 %v533, %v577
  %v582 = vld [vmem:[%s3 + $0x300] sm:$0xff]
  %v583 = vld [vmem:[%s3 + $0x308] sm:$0xff]
  %v584 = vld [vmem:[%s3 + $0x310] sm:$0xff]
  %v585 = vld [vmem:[%s3 + $0x318] sm:$0xff]
  %v586 = vmul.f32 %v225, %v582
  %v587 = vmul.f32 %v226, %v583
  %v588 = vmul.f32 %v227, %v584
  %v589 = vmul.f32 %v228, %v585
  %v590 = vadd.f32 %v542, %v586
  %v591 = vadd.f32 %v543, %v587
  %v592 = vadd.f32 %v544, %v588
  %v593 = vadd.f32 %v545, %v589
  %v594 = vld [vmem:[%s3 + $0x320] sm:$0xff]
  %v595 = vld [vmem:[%s3 + $0x328] sm:$0xff]
  %v596 = vld [vmem:[%s3 + $0x330] sm:$0xff]
  %v597 = vld [vmem:[%s3 + $0x338] sm:$0xff]
  %v598 = vmul.f32 %v238, %v594
  %v599 = vmul.f32 %v237, %v595
  %v600 = vmul.f32 %v236, %v596
  %v601 = vmul.f32 %v239, %v597
  %v602 = vadd.f32 %v554, %v598
  %v603 = vadd.f32 %v555, %v599
  %v604 = vadd.f32 %v556, %v600
  %v605 = vadd.f32 %v557, %v601
  %v606 = vld [vmem:[%s3 + $0x340] sm:$0xff]
  %v607 = vld [vmem:[%s3 + $0x348] sm:$0xff]
  %v608 = vld [vmem:[%s3 + $0x350] sm:$0xff]
  %v609 = vld [vmem:[%s3 + $0x358] sm:$0xff]
  %v610 = vmul.f32 %v259, %v606
  %v611 = vmul.f32 %v258, %v607
  %v612 = vmul.f32 %v257, %v608
  %v613 = vmul.f32 %v260, %v609
  %v614 = vadd.f32 %v566, %v610
  %v615 = vadd.f32 %v567, %v611
  %v616 = vadd.f32 %v568, %v612
  %v617 = vadd.f32 %v569, %v613
  %v618 = vld [vmem:[%s3 + $0x360] sm:$0xff]
  %v619 = vld [vmem:[%s3 + $0x368] sm:$0xff]
  %v620 = vld [vmem:[%s3 + $0x370] sm:$0xff]
  %v621 = vld [vmem:[%s3 + $0x378] sm:$0xff]
  %v622 = vmul.f32 %v280, %v618
  %v623 = vmul.f32 %v279, %v619
  %v624 = vmul.f32 %v278, %v620
  %v625 = vmul.f32 %v281, %v621
  %v626 = vadd.f32 %v578, %v622
  %v627 = vadd.f32 %v579, %v623
  %v628 = vadd.f32 %v580, %v624
  %v629 = vadd.f32 %v581, %v625
  %v630 = vld [vmem:[%s3 + $0x380] sm:$0xff]
  %v631 = vld [vmem:[%s3 + $0x388] sm:$0xff]
  %v632 = vld [vmem:[%s3 + $0x390] sm:$0xff]
  %v633 = vld [vmem:[%s3 + $0x398] sm:$0xff]
  %v634 = vmul.f32 %v238, %v630
  %v635 = vmul.f32 %v237, %v631
  %v636 = vmul.f32 %v236, %v632
  %v637 = vmul.f32 %v239, %v633
  %v638 = vadd.f32 %v590, %v634
  %v639 = vadd.f32 %v591, %v635
  %v640 = vadd.f32 %v592, %v636
  %v641 = vadd.f32 %v593, %v637
  %v642 = vld [vmem:[%s3 + $0x3a0] sm:$0xff]
  %v643 = vld [vmem:[%s3 + $0x3a8] sm:$0xff]
  %v644 = vld [vmem:[%s3 + $0x3b0] sm:$0xff]
  %v645 = vld [vmem:[%s3 + $0x3b8] sm:$0xff]
  %v646 = vmul.f32 %v259, %v642
  %v647 = vmul.f32 %v258, %v643
  %v648 = vmul.f32 %v257, %v644
  %v649 = vmul.f32 %v260, %v645
  %v650 = vadd.f32 %v602, %v646
  %v651 = vadd.f32 %v603, %v647
  %v652 = vadd.f32 %v604, %v648
  %v653 = vadd.f32 %v605, %v649
  %v654 = vld [vmem:[%s3 + $0x3c0] sm:$0xff]
  %v655 = vld [vmem:[%s3 + $0x3c8] sm:$0xff]
  %v656 = vld [vmem:[%s3 + $0x3d0] sm:$0xff]
  %v657 = vld [vmem:[%s3 + $0x3d8] sm:$0xff]
  %v658 = vmul.f32 %v280, %v654
  %v659 = vmul.f32 %v279, %v655
  %v660 = vmul.f32 %v278, %v656
  %v661 = vmul.f32 %v281, %v657
  %v662 = vadd.f32 %v614, %v658
  %v663 = vadd.f32 %v615, %v659
  %v664 = vadd.f32 %v616, %v660
  %v665 = vadd.f32 %v617, %v661
  %v666 = vld [vmem:[%s3 + $0x3e0] sm:$0xff]
  %v667 = vld [vmem:[%s3 + $0x3e8] sm:$0xff]
  %v668 = vld [vmem:[%s3 + $0x3f0] sm:$0xff]
  %v669 = vld [vmem:[%s3 + $0x3f8] sm:$0xff]
  %v670 = vmul.f32 %v301, %v666
  %v671 = vmul.f32 %v300, %v667
  %v672 = vmul.f32 %v299, %v668
  %v673 = vmul.f32 %v302, %v669
  %v674 = vadd.f32 %v626, %v670
  %v675 = vadd.f32 %v627, %v671
  %v676 = vadd.f32 %v628, %v672
  %v677 = vadd.f32 %v629, %v673
  %v678 = vld [vmem:[%s3 + $0x400] sm:$0xff]
  %v679 = vld [vmem:[%s3 + $0x408] sm:$0xff]
  %v680 = vld [vmem:[%s3 + $0x410] sm:$0xff]
  %v681 = vld [vmem:[%s3 + $0x418] sm:$0xff]
  %v682 = vmul.f32 %v322, %v678
  %v683 = vmul.f32 %v321, %v679
  %v684 = vmul.f32 %v320, %v680
  %v685 = vmul.f32 %v323, %v681
  %v686 = vadd.f32 %v638, %v682
  %v687 = vadd.f32 %v639, %v683
  %v688 = vadd.f32 %v640, %v684
  %v689 = vadd.f32 %v641, %v685
  %v690 = vld [vmem:[%s3 + $0x420] sm:$0xff]
  %v691 = vld [vmem:[%s3 + $0x428] sm:$0xff]
  %v692 = vld [vmem:[%s3 + $0x430] sm:$0xff]
  %v693 = vld [vmem:[%s3 + $0x438] sm:$0xff]
  %v694 = vmul.f32 %v343, %v690
  %v695 = vmul.f32 %v342, %v691
  %v696 = vmul.f32 %v341, %v692
  %v697 = vmul.f32 %v344, %v693
  %v698 = vadd.f32 %v650, %v694
  %v699 = vadd.f32 %v651, %v695
  %v700 = vadd.f32 %v652, %v696
  %v701 = vadd.f32 %v653, %v697
  %v702 = vld [vmem:[%s3 + $0x440] sm:$0xff]
  %v703 = vld [vmem:[%s3 + $0x448] sm:$0xff]
  %v704 = vld [vmem:[%s3 + $0x450] sm:$0xff]
  %v705 = vld [vmem:[%s3 + $0x458] sm:$0xff]
  %v706 = vmul.f32 %v364, %v702
  %v707 = vmul.f32 %v363, %v703
  %v708 = vmul.f32 %v362, %v704
  %v709 = vmul.f32 %v365, %v705
  %v710 = vadd.f32 %v662, %v706
  %v711 = vadd.f32 %v663, %v707
  %v712 = vadd.f32 %v664, %v708
  %v713 = vadd.f32 %v665, %v709
  %v714 = vld [vmem:[%s3 + $0x460] sm:$0xff]
  %v715 = vld [vmem:[%s3 + $0x468] sm:$0xff]
  %v716 = vld [vmem:[%s3 + $0x470] sm:$0xff]
  %v717 = vld [vmem:[%s3 + $0x478] sm:$0xff]
  %v718 = vmul.f32 %v322, %v714
  %v719 = vmul.f32 %v321, %v715
  %v720 = vmul.f32 %v320, %v716
  %v721 = vmul.f32 %v323, %v717
  %v722 = vadd.f32 %v674, %v718
  %v723 = vadd.f32 %v675, %v719
  %v724 = vadd.f32 %v676, %v720
  %v725 = vadd.f32 %v677, %v721
  %v726 = vld [vmem:[%s3 + $0x480] sm:$0xff]
  %v727 = vld [vmem:[%s3 + $0x488] sm:$0xff]
  %v728 = vld [vmem:[%s3 + $0x490] sm:$0xff]
  %v729 = vld [vmem:[%s3 + $0x498] sm:$0xff]
  %v730 = vmul.f32 %v343, %v726
  %v731 = vmul.f32 %v342, %v727
  %v732 = vmul.f32 %v341, %v728
  %v733 = vmul.f32 %v344, %v729
  %v734 = vadd.f32 %v686, %v730
  %v735 = vadd.f32 %v687, %v731
  %v736 = vadd.f32 %v688, %v732
  %v737 = vadd.f32 %v689, %v733
  %v738 = vld [vmem:[%s3 + $0x4a0] sm:$0xff]
  %v739 = vld [vmem:[%s3 + $0x4a8] sm:$0xff]
  %v740 = vld [vmem:[%s3 + $0x4b0] sm:$0xff]
  %v741 = vld [vmem:[%s3 + $0x4b8] sm:$0xff]
  %v742 = vmul.f32 %v364, %v738
  %v743 = vmul.f32 %v363, %v739
  %v744 = vmul.f32 %v362, %v740
  %v745 = vmul.f32 %v365, %v741
  %v746 = vadd.f32 %v698, %v742
  %v747 = vadd.f32 %v699, %v743
  %v748 = vadd.f32 %v700, %v744
  %v749 = vadd.f32 %v701, %v745
  %v750 = vld [vmem:[%s3 + $0x4c0] sm:$0xff]
  %v751 = vld [vmem:[%s3 + $0x4c8] sm:$0xff]
  %v752 = vld [vmem:[%s3 + $0x4d0] sm:$0xff]
  %v753 = vld [vmem:[%s3 + $0x4d8] sm:$0xff]
  %v754 = vmul.f32 %v226, %v750
  %v755 = vmul.f32 %v227, %v751
  %v756 = vmul.f32 %v228, %v752
  %v757 = vmul.f32 %v225, %v753
  %v758 = vadd.f32 %v710, %v754
  %v759 = vadd.f32 %v711, %v755
  %v760 = vadd.f32 %v712, %v756
  %v761 = vadd.f32 %v713, %v757
  %v762 = vld [vmem:[%s3 + $0x4e0] sm:$0xff]
  %v763 = vld [vmem:[%s3 + $0x4e8] sm:$0xff]
  %v764 = vld [vmem:[%s3 + $0x4f0] sm:$0xff]
  %v765 = vld [vmem:[%s3 + $0x4f8] sm:$0xff]
  %v766 = vmul.f32 %v237, %v762
  %v767 = vmul.f32 %v236, %v763
  %v768 = vmul.f32 %v239, %v764
  %v769 = vmul.f32 %v238, %v765
  %v770 = vadd.f32 %v722, %v766
  %v771 = vadd.f32 %v723, %v767
  %v772 = vadd.f32 %v724, %v768
  %v773 = vadd.f32 %v725, %v769
  %v774 = vld [vmem:[%s3 + $0x500] sm:$0xff]
  %v775 = vld [vmem:[%s3 + $0x508] sm:$0xff]
  %v776 = vld [vmem:[%s3 + $0x510] sm:$0xff]
  %v777 = vld [vmem:[%s3 + $0x518] sm:$0xff]
  %v778 = vmul.f32 %v258, %v774
  %v779 = vmul.f32 %v257, %v775
  %v780 = vmul.f32 %v260, %v776
  %v781 = vmul.f32 %v259, %v777
  %v782 = vadd.f32 %v734, %v778
  %v783 = vadd.f32 %v735, %v779
  %v784 = vadd.f32 %v736, %v780
  %v785 = vadd.f32 %v737, %v781
  %v786 = vld [vmem:[%s3 + $0x520] sm:$0xff]
  %v787 = vld [vmem:[%s3 + $0x528] sm:$0xff]
  %v788 = vld [vmem:[%s3 + $0x530] sm:$0xff]
  %v789 = vld [vmem:[%s3 + $0x538] sm:$0xff]
  %v790 = vmul.f32 %v279, %v786
  %v791 = vmul.f32 %v278, %v787
  %v792 = vmul.f32 %v281, %v788
  %v793 = vmul.f32 %v280, %v789
  %v794 = vadd.f32 %v746, %v790
  %v795 = vadd.f32 %v747, %v791
  %v796 = vadd.f32 %v748, %v792
  %v797 = vadd.f32 %v749, %v793
  %v798 = vld [vmem:[%s3 + $0x540] sm:$0xff]
  %v799 = vld [vmem:[%s3 + $0x548] sm:$0xff]
  %v800 = vld [vmem:[%s3 + $0x550] sm:$0xff]
  %v801 = vld [vmem:[%s3 + $0x558] sm:$0xff]
  %v802 = vmul.f32 %v237, %v798
  %v803 = vmul.f32 %v236, %v799
  %v804 = vmul.f32 %v239, %v800
  %v805 = vmul.f32 %v238, %v801
  %v806 = vadd.f32 %v758, %v802
  %v807 = vadd.f32 %v759, %v803
  %v808 = vadd.f32 %v760, %v804
  %v809 = vadd.f32 %v761, %v805
  %v810 = vld [vmem:[%s3 + $0x560] sm:$0xff]
  %v811 = vld [vmem:[%s3 + $0x568] sm:$0xff]
  %v812 = vld [vmem:[%s3 + $0x570] sm:$0xff]
  %v813 = vld [vmem:[%s3 + $0x578] sm:$0xff]
  %v814 = vmul.f32 %v258, %v810
  %v815 = vmul.f32 %v257, %v811
  %v816 = vmul.f32 %v260, %v812
  %v817 = vmul.f32 %v259, %v813
  %v818 = vadd.f32 %v770, %v814
  %v819 = vadd.f32 %v771, %v815
  %v820 = vadd.f32 %v772, %v816
  %v821 = vadd.f32 %v773, %v817
  %v822 = vld [vmem:[%s3 + $0x580] sm:$0xff]
  %v823 = vld [vmem:[%s3 + $0x588] sm:$0xff]
  %v824 = vld [vmem:[%s3 + $0x590] sm:$0xff]
  %v825 = vld [vmem:[%s3 + $0x598] sm:$0xff]
  %v826 = vmul.f32 %v279, %v822
  %v827 = vmul.f32 %v278, %v823
  %v828 = vmul.f32 %v281, %v824
  %v829 = vmul.f32 %v280, %v825
  %v830 = vadd.f32 %v782, %v826
  %v831 = vadd.f32 %v783, %v827
  %v832 = vadd.f32 %v784, %v828
  %v833 = vadd.f32 %v785, %v829
  %v834 = vld [vmem:[%s3 + $0x5a0] sm:$0xff]
  %v835 = vld [vmem:[%s3 + $0x5a8] sm:$0xff]
  %v836 = vld [vmem:[%s3 + $0x5b0] sm:$0xff]
  %v837 = vld [vmem:[%s3 + $0x5b8] sm:$0xff]
  %v838 = vmul.f32 %v300, %v834
  %v839 = vmul.f32 %v299, %v835
  %v840 = vmul.f32 %v302, %v836
  %v841 = vmul.f32 %v301, %v837
  %v842 = vadd.f32 %v794, %v838
  %v843 = vadd.f32 %v795, %v839
  %v844 = vadd.f32 %v796, %v840
  %v845 = vadd.f32 %v797, %v841
  %v846 = vld [vmem:[%s3 + $0x5c0] sm:$0xff]
  %v847 = vld [vmem:[%s3 + $0x5c8] sm:$0xff]
  %v848 = vld [vmem:[%s3 + $0x5d0] sm:$0xff]
  %v849 = vld [vmem:[%s3 + $0x5d8] sm:$0xff]
  %v850 = vmul.f32 %v321, %v846
  %v851 = vmul.f32 %v320, %v847
  %v852 = vmul.f32 %v323, %v848
  %v853 = vmul.f32 %v322, %v849
  %v854 = vadd.f32 %v806, %v850
  %v855 = vadd.f32 %v807, %v851
  %v856 = vadd.f32 %v808, %v852
  %v857 = vadd.f32 %v809, %v853
  %v858 = vld [vmem:[%s3 + $0x5e0] sm:$0xff]
  %v859 = vld [vmem:[%s3 + $0x5e8] sm:$0xff]
  %v860 = vld [vmem:[%s3 + $0x5f0] sm:$0xff]
  %v861 = vld [vmem:[%s3 + $0x5f8] sm:$0xff]
  %v862 = vmul.f32 %v342, %v858
  %v863 = vmul.f32 %v341, %v859
  %v864 = vmul.f32 %v344, %v860
  %v865 = vmul.f32 %v343, %v861
  %v866 = vadd.f32 %v818, %v862
  %v867 = vadd.f32 %v819, %v863
  %v868 = vadd.f32 %v820, %v864
  %v869 = vadd.f32 %v821, %v865
  %v870 = vld [vmem:[%s3 + $0x600] sm:$0xff]
  %v871 = vld [vmem:[%s3 + $0x608] sm:$0xff]
  %v872 = vld [vmem:[%s3 + $0x610] sm:$0xff]
  %v873 = vld [vmem:[%s3 + $0x618] sm:$0xff]
  %v874 = vmul.f32 %v363, %v870
  %v875 = vmul.f32 %v362, %v871
  %v876 = vmul.f32 %v365, %v872
  %v877 = vmul.f32 %v364, %v873
  %v878 = vadd.f32 %v830, %v874
  %v879 = vadd.f32 %v831, %v875
  %v880 = vadd.f32 %v832, %v876
  %v881 = vadd.f32 %v833, %v877
  %v882 = vadd.f32 %v878, %v842
  %v883 = vadd.f32 %v879, %v843
  %v884 = vadd.f32 %v880, %v844
  %v885 = vadd.f32 %v881, %v845
  %v886 = vadd.f32 %v854, %v866
  %v887 = vadd.f32 %v855, %v867
  %v888 = vadd.f32 %v856, %v868
  %v889 = vadd.f32 %v857, %v869
  %v890 = vadd.f32 %v882, %v886
  %v891 = vadd.f32 %v883, %v887
  %v892 = vadd.f32 %v884, %v888
  %v893 = vadd.f32 %v885, %v889
  %v894 = vlaneseq
  %v895 = vshrl.u32 %v894, 7
  %v896 = vsub.s32 3, %v895
  %v897 = vrot.slane %v33, %v896
  %v898 = vadd.f32 %v890, %v897
  %v899 = vadd.f32 %v891, %v897
  %v900 = vadd.f32 %v892, %v897
  %v901 = vadd.f32 %v893, %v897
  %902 = vadd.xlane.f32.xlu0 %v898
  %v903 = vpop.xlane.xlu0 %902
  %904 = vadd.xlane.f32.xlu0 %v899
  %v905 = vpop.xlane.xlu0 %904
  %906 = vadd.xlane.f32.xlu0 %v900
  %v907 = vpop.xlane.xlu0 %906
  %908 = vadd.xlane.f32.xlu0 %v901
  %v909 = vpop.xlane.xlu0 %908
  %v910 = vmul.f32 %v903, %v176
  %v911 = vmul.f32 %v905, %v176
  %v912 = vmul.f32 %v907, %v176
  %v913 = vmul.f32 %v909, %v176
  %v914 = vsub.f32 %v898, %v910
  %v915 = vsub.f32 %v899, %v911
  %v916 = vsub.f32 %v900, %v912
  %v917 = vsub.f32 %v901, %v913
  %v918 = vmul.f32 %v914, %v914
  %v919 = vmul.f32 %v915, %v915
  %v920 = vmul.f32 %v916, %v916
  %v921 = vmul.f32 %v917, %v917
  %922 = vadd.xlane.f32.xlu0 %v918
  %v923 = vpop.xlane.xlu0 %922
  %924 = vadd.xlane.f32.xlu0 %v919
  %v925 = vpop.xlane.xlu0 %924
  %926 = vadd.xlane.f32.xlu0 %v920
  %v927 = vpop.xlane.xlu0 %926
  %928 = vadd.xlane.f32.xlu0 %v921
  %v929 = vpop.xlane.xlu0 %928
  %v930 = vmul.f32 %v923, %v176
  %v931 = vmul.f32 %v925, %v176
  %v932 = vmul.f32 %v927, %v176
  %v933 = vmul.f32 %v929, %v176
  %v934 = vadd.f32 %v930, 1e-06
  %v935 = vadd.f32 %v931, 1e-06
  %v936 = vadd.f32 %v932, 1e-06
  %v937 = vadd.f32 %v933, 1e-06
  %v938 = vrsqrt.pop %v934
  %v939 = vrsqrt.pop %v935
  %v940 = vrsqrt.pop %v936
  %v941 = vrsqrt.pop %v937
  %v942 = vmul.f32 %v914, %v938
  %v943 = vmul.f32 %v915, %v939
  %v944 = vmul.f32 %v916, %v940
  %v945 = vmul.f32 %v917, %v941
  %v946 = vlaneseq
  %v947 = vshrl.u32 %v946, 7
  %v948 = vsub.s32 4, %v947
  %v949 = vrot.slane %v33, %v948
  %v950 = vmul.f32 %v942, %v949
  %v951 = vmul.f32 %v943, %v949
  %v952 = vmul.f32 %v944, %v949
  %v953 = vmul.f32 %v945, %v949
  %v954 = vlaneseq
  %v955 = vshrl.u32 %v954, 7
  %v956 = vsub.s32 5, %v955
  %v957 = vrot.slane %v33, %v956
  %v958 = vadd.f32 %v950, %v957
  %v959 = vadd.f32 %v951, %v957
  %v960 = vadd.f32 %v952, %v957
  %v961 = vadd.f32 %v953, %v957
  %v962 = vpack.c.bf16 %v959, %v958
  %v963 = vpack.c.bf16 %v961, %v960
  %v964 = vld [vmem:[%s4] sm:$0xff]
  %v965 = vld [vmem:[%s4 + $0x8] sm:$0xff]
  %v966 = vld [vmem:[%s4 + $0x10] sm:$0xff]
  %v967 = vld [vmem:[%s4 + $0x18] sm:$0xff]
  %v968 = vld [vmem:[%s4 + $0x20] sm:$0xff]
  %v969 = vld [vmem:[%s4 + $0x28] sm:$0xff]
  %v970 = vld [vmem:[%s4 + $0x30] sm:$0xff]
  %v971 = vld [vmem:[%s4 + $0x38] sm:$0xff]
  %v972 = vld [vmem:[%s4 + $0x40] sm:$0xff]
  %v973 = vld [vmem:[%s4 + $0x48] sm:$0xff]
  %v974 = vld [vmem:[%s4 + $0x50] sm:$0xff]
  %v975 = vld [vmem:[%s4 + $0x58] sm:$0xff]
  %v976 = vld [vmem:[%s4 + $0x60] sm:$0xff]
  %v977 = vld [vmem:[%s4 + $0x68] sm:$0xff]
  %v978 = vld [vmem:[%s4 + $0x70] sm:$0xff]
  %v979 = vld [vmem:[%s4 + $0x78] sm:$0xff]
  %v980 = vld [vmem:[%s4 + $0x80] sm:$0xff]
  %v981 = vld [vmem:[%s4 + $0x88] sm:$0xff]
  %v982 = vld [vmem:[%s4 + $0x90] sm:$0xff]
  %v983 = vld [vmem:[%s4 + $0x98] sm:$0xff]
  %v984 = vld [vmem:[%s4 + $0xa0] sm:$0xff]
  %v985 = vld [vmem:[%s4 + $0xa8] sm:$0xff]
  %v986 = vld [vmem:[%s4 + $0xb0] sm:$0xff]
  %v987 = vld [vmem:[%s4 + $0xb8] sm:$0xff]
  %v988 = vld [vmem:[%s4 + $0xc0] sm:$0xff]
  %v989 = vld [vmem:[%s4 + $0xc8] sm:$0xff]
  %v990 = vld [vmem:[%s4 + $0xd0] sm:$0xff]
  %v991 = vld [vmem:[%s4 + $0xd8] sm:$0xff]
  %v992 = vld [vmem:[%s4 + $0xe0] sm:$0xff]
  %v993 = vld [vmem:[%s4 + $0xe8] sm:$0xff]
  %v994 = vld [vmem:[%s4 + $0xf0] sm:$0xff]
  %v995 = vld [vmem:[%s4 + $0xf8] sm:$0xff]
  %v996 = vld [vmem:[%s5] sm:$0xf]
  %v998 = vlaneseq
  %v999 = vshrl.u32 %v998, 7
  %v1000 = vsub.s32 0, %v999
  %v1001 = vrot.slane %v996, %v1000
  %v1002 = vlaneseq
  %v1003 = vshrl.u32 %v1002, 7
  %v1004 = vsub.s32 1, %v1003
  %v1005 = vrot.slane %v996, %v1004
  %v1006 = vlaneseq
  %v1007 = vshrl.u32 %v1006, 7
  %v1008 = vsub.s32 2, %v1007
  %v1009 = vrot.slane %v996, %v1008
  %v1010 = vlaneseq
  %v1011 = vshrl.u32 %v1010, 7
  %v1012 = vsub.s32 3, %v1011
  %v1013 = vrot.slane %v996, %v1012
  %v1050 = vunpack.c.l.b16 %v964
  %v1051 = vunpack.c.h.b16 %v964
  %v1052 = vunpack.c.l.b16 %v965
  %v1053 = vunpack.c.h.b16 %v965
  %v1054 = vunpack.c.l.b16 %v966
  %v1055 = vunpack.c.h.b16 %v966
  %v1056 = vunpack.c.l.b16 %v967
  %v1057 = vunpack.c.h.b16 %v967
  %v1058 = vunpack.c.l.b16 %v968
  %v1059 = vunpack.c.h.b16 %v968
  %v1060 = vunpack.c.l.b16 %v969
  %v1061 = vunpack.c.h.b16 %v969
  %v1062 = vunpack.c.l.b16 %v970
  %v1063 = vunpack.c.h.b16 %v970
  %v1064 = vunpack.c.l.b16 %v971
  %v1065 = vunpack.c.h.b16 %v971
  %v1066 = vunpack.c.l.b16 %v972
  %v1067 = vunpack.c.h.b16 %v972
  %v1068 = vunpack.c.l.b16 %v973
  %v1069 = vunpack.c.h.b16 %v973
  %v1070 = vunpack.c.l.b16 %v974
  %v1071 = vunpack.c.h.b16 %v974
  %v1072 = vunpack.c.l.b16 %v975
  %v1073 = vunpack.c.h.b16 %v975
  %v1074 = vunpack.c.l.b16 %v976
  %v1075 = vunpack.c.h.b16 %v976
  %v1076 = vunpack.c.l.b16 %v977
  %v1077 = vunpack.c.h.b16 %v977
  %v1078 = vunpack.c.l.b16 %v978
  %v1079 = vunpack.c.h.b16 %v978
  %v1080 = vunpack.c.l.b16 %v979
  %v1081 = vunpack.c.h.b16 %v979
  %v1082 = vunpack.c.l.b16 %v980
  %v1083 = vunpack.c.h.b16 %v980
  %v1084 = vunpack.c.l.b16 %v981
  %v1085 = vunpack.c.h.b16 %v981
  %v1086 = vunpack.c.l.b16 %v982
  %v1087 = vunpack.c.h.b16 %v982
  %v1088 = vunpack.c.l.b16 %v983
  %v1089 = vunpack.c.h.b16 %v983
  %v1090 = vunpack.c.l.b16 %v984
  %v1091 = vunpack.c.h.b16 %v984
  %v1092 = vunpack.c.l.b16 %v985
  %v1093 = vunpack.c.h.b16 %v985
  %v1094 = vunpack.c.l.b16 %v986
  %v1095 = vunpack.c.h.b16 %v986
  %v1096 = vunpack.c.l.b16 %v987
  %v1097 = vunpack.c.h.b16 %v987
  %v1098 = vunpack.c.l.b16 %v988
  %v1099 = vunpack.c.h.b16 %v988
  %v1100 = vunpack.c.l.b16 %v989
  %v1101 = vunpack.c.h.b16 %v989
  %v1102 = vunpack.c.l.b16 %v990
  %v1103 = vunpack.c.h.b16 %v990
  %v1104 = vunpack.c.l.b16 %v991
  %v1105 = vunpack.c.h.b16 %v991
  %v1106 = vunpack.c.l.b16 %v992
  %v1107 = vunpack.c.h.b16 %v992
  %v1108 = vunpack.c.l.b16 %v993
  %v1109 = vunpack.c.h.b16 %v993
  %v1110 = vunpack.c.l.b16 %v994
  %v1111 = vunpack.c.h.b16 %v994
  %v1112 = vunpack.c.l.b16 %v995
  %v1113 = vunpack.c.h.b16 %v995
  %v1114 = vpack.c.b16 %v1054, %v1050
  %v1115 = vpack.c.b16 %v1055, %v1051
  %v1116 = vpack.c.b16 %v1056, %v1052
  %v1117 = vpack.c.b16 %v1057, %v1053
  %v1118 = vpack.c.b16 %v1062, %v1058
  %v1119 = vpack.c.b16 %v1063, %v1059
  %v1120 = vpack.c.b16 %v1064, %v1060
  %v1121 = vpack.c.b16 %v1065, %v1061
  %v1122 = vpack.c.b16 %v1070, %v1066
  %v1123 = vpack.c.b16 %v1071, %v1067
  %v1124 = vpack.c.b16 %v1072, %v1068
  %v1125 = vpack.c.b16 %v1073, %v1069
  %v1126 = vpack.c.b16 %v1078, %v1074
  %v1127 = vpack.c.b16 %v1079, %v1075
  %v1128 = vpack.c.b16 %v1080, %v1076
  %v1129 = vpack.c.b16 %v1081, %v1077
  %v1130 = vpack.c.b16 %v1086, %v1082
  %v1131 = vpack.c.b16 %v1087, %v1083
  %v1132 = vpack.c.b16 %v1088, %v1084
  %v1133 = vpack.c.b16 %v1089, %v1085
  %v1134 = vpack.c.b16 %v1094, %v1090
  %v1135 = vpack.c.b16 %v1095, %v1091
  %v1136 = vpack.c.b16 %v1096, %v1092
  %v1137 = vpack.c.b16 %v1097, %v1093
  %v1138 = vpack.c.b16 %v1102, %v1098
  %v1139 = vpack.c.b16 %v1103, %v1099
  %v1140 = vpack.c.b16 %v1104, %v1100
  %v1141 = vpack.c.b16 %v1105, %v1101
  %v1142 = vpack.c.b16 %v1110, %v1106
  %v1143 = vpack.c.b16 %v1111, %v1107
  %v1144 = vpack.c.b16 %v1112, %v1108
  %v1145 = vpack.c.b16 %v1113, %v1109
  %1178 = vmatprep.subr.bf16.mxu0 %v1115
  %1179 = vmatpush1.bf16.msra.mxu0 %v1114
  %1180 = vmatprep.subr.bf16.mxu0 %v1119
  %1181 = vmatpush1.bf16.msra.mxu0 %v1118
  %1182 = vmatprep.subr.bf16.mxu0 %v1123
  %1183 = vmatpush1.bf16.msra.mxu0 %v1122
  %1184 = vmatprep.subr.bf16.mxu0 %v1127
  %1185 = vmatpush1.bf16.msra.mxu0 %v1126
  %1186 = vmatprep.subr.bf16.mxu0 %v1131
  %1187 = vmatpush1.bf16.msra.mxu0 %v1130
  %1188 = vmatprep.subr.bf16.mxu0 %v1135
  %1189 = vmatpush1.bf16.msra.mxu0 %v1134
  %1190 = vmatprep.subr.bf16.mxu0 %v1139
  %1191 = vmatpush1.bf16.msra.mxu0 %v1138
  %1192 = vmatprep.subr.bf16.mxu0 %v1143
  %1193 = vmatpush1.bf16.msra.mxu0 %v1142
  %1194 = vmatprep.subr.bf16.mxu0 0
  %1195 = vmatpush1.bf16.msra.mxu0 0
  %1196 = vmatprep.subr.bf16.mxu0 0
  %1197 = vmatpush1.bf16.msra.mxu0 0
  %1198 = vmatprep.subr.bf16.mxu0 0
  %1199 = vmatpush1.bf16.msra.mxu0 0
  %1200 = vmatprep.subr.bf16.mxu0 0
  %1201 = vmatpush1.bf16.msra.mxu0 0
  %1202 = vmatprep.subr.bf16.mxu0 0
  %1203 = vmatpush1.bf16.msra.mxu0 0
  %1204 = vmatprep.subr.bf16.mxu0 0
  %1205 = vmatpush1.bf16.msra.mxu0 0
  %1206 = vmatprep.subr.bf16.mxu0 0
  %1207 = vmatpush1.bf16.msra.mxu0 0
  %1208 = vmatprep.subr.bf16.mxu0 0
  %1209 = vmatpush1.bf16.msra.mxu0 0
  %1210 = vmatprep.mubr.bf16.mxu0 0
  %1211 = vmatmul.mubr.bf16.gmra.mrb[0].mxu0 %v962
  %v1212 = vpop.f32.mrb[0].mxu0
  %v1213 = vadd.f32 %v1001, %v1212
  %v1214 = vpop.f32.mrb[0].mxu0
  %v1215 = vadd.f32 %v1005, %v1214
  %v1216 = vpop.f32.mrb[0].mxu0
  %v1217 = vadd.f32 %v1001, %v1216
  %v1218 = vpop.f32.mrb[0].mxu0
  %v1219 = vadd.f32 %v1005, %v1218
  %1220 = vmatprep.mubr.bf16.mxu0 0
  %1221 = vmatmul.mubr.bf16.gmra.mrb[0].mxu0 %v963
  %v1222 = vpop.f32.mrb[0].mxu0
  %v1223 = vadd.f32 %v1001, %v1222
  %v1224 = vpop.f32.mrb[0].mxu0
  %v1225 = vadd.f32 %v1005, %v1224
  %v1226 = vpop.f32.mrb[0].mxu0
  %v1227 = vadd.f32 %v1001, %v1226
  %v1228 = vpop.f32.mrb[0].mxu0
  %v1229 = vadd.f32 %v1005, %v1228
  %1230 = vdwg.mxu0
  %1231 = vmatprep.subr.bf16.mxu0 %v1117
  %1232 = vmatpush1.bf16.msra.mxu0 %v1116
  %1233 = vmatprep.subr.bf16.mxu0 %v1121
  %1234 = vmatpush1.bf16.msra.mxu0 %v1120
  %1235 = vmatprep.subr.bf16.mxu0 %v1125
  %1236 = vmatpush1.bf16.msra.mxu0 %v1124
  %1237 = vmatprep.subr.bf16.mxu0 %v1129
  %1238 = vmatpush1.bf16.msra.mxu0 %v1128
  %1239 = vmatprep.subr.bf16.mxu0 %v1133
  %1240 = vmatpush1.bf16.msra.mxu0 %v1132
  %1241 = vmatprep.subr.bf16.mxu0 %v1137
  %1242 = vmatpush1.bf16.msra.mxu0 %v1136
  %1243 = vmatprep.subr.bf16.mxu0 %v1141
  %1244 = vmatpush1.bf16.msra.mxu0 %v1140
  %1245 = vmatprep.subr.bf16.mxu0 %v1145
  %1246 = vmatpush1.bf16.msra.mxu0 %v1144
  %1247 = vmatprep.subr.bf16.mxu0 0
  %1248 = vmatpush1.bf16.msra.mxu0 0
  %1249 = vmatprep.subr.bf16.mxu0 0
  %1250 = vmatpush1.bf16.msra.mxu0 0
  %1251 = vmatprep.subr.bf16.mxu0 0
  %1252 = vmatpush1.bf16.msra.mxu0 0
  %1253 = vmatprep.subr.bf16.mxu0 0
  %1254 = vmatpush1.bf16.msra.mxu0 0
  %1255 = vmatprep.subr.bf16.mxu0 0
  %1256 = vmatpush1.bf16.msra.mxu0 0
  %1257 = vmatprep.subr.bf16.mxu0 0
  %1258 = vmatpush1.bf16.msra.mxu0 0
  %1259 = vmatprep.subr.bf16.mxu0 0
  %1260 = vmatpush1.bf16.msra.mxu0 0
  %1261 = vmatprep.subr.bf16.mxu0 0
  %1262 = vmatpush1.bf16.msra.mxu0 0
  %1263 = vmatprep.mubr.bf16.mxu0 0
  %1264 = vmatmul.mubr.bf16.gmra.mrb[0].mxu0 %v962
  %v1265 = vpop.f32.mrb[0].mxu0
  %v1266 = vadd.f32 %v1009, %v1265
  %v1267 = vpop.f32.mrb[0].mxu0
  %v1268 = vadd.f32 %v1013, %v1267
  %v1269 = vpop.f32.mrb[0].mxu0
  %v1270 = vadd.f32 %v1009, %v1269
  %v1271 = vpop.f32.mrb[0].mxu0
  %v1272 = vadd.f32 %v1013, %v1271
  %1273 = vmatprep.mubr.bf16.mxu0 0
  %1274 = vmatmul.mubr.bf16.gmra.mrb[0].mxu0 %v963
  %v1275 = vpop.f32.mrb[0].mxu0
  %v1276 = vadd.f32 %v1009, %v1275
  %v1277 = vpop.f32.mrb[0].mxu0
  %v1278 = vadd.f32 %v1013, %v1277
  %v1279 = vpop.f32.mrb[0].mxu0
  %v1280 = vadd.f32 %v1009, %v1279
  %v1281 = vpop.f32.mrb[0].mxu0
  %v1282 = vadd.f32 %v1013, %v1281
  %1283 = vdwg.mxu0
  %v1284 = vmul.f32 %v1213, %v1213
  %v1285 = vmul.f32 %v1215, %v1215
  %v1286 = vmul.f32 %v1266, %v1266
  %v1287 = vmul.f32 %v1268, %v1268
  %v1288 = vmul.f32 %v1217, %v1217
  %v1289 = vmul.f32 %v1219, %v1219
  %v1290 = vmul.f32 %v1270, %v1270
  %v1291 = vmul.f32 %v1272, %v1272
  %v1292 = vmul.f32 %v1223, %v1223
  %v1293 = vmul.f32 %v1225, %v1225
  %v1294 = vmul.f32 %v1276, %v1276
  %v1295 = vmul.f32 %v1278, %v1278
  %v1296 = vmul.f32 %v1227, %v1227
  %v1297 = vmul.f32 %v1229, %v1229
  %v1298 = vmul.f32 %v1280, %v1280
  %v1299 = vmul.f32 %v1282, %v1282
  %v1300 = vmul.f32 %v1213, %v1284
  %v1301 = vmul.f32 %v1215, %v1285
  %v1302 = vmul.f32 %v1266, %v1286
  %v1303 = vmul.f32 %v1268, %v1287
  %v1304 = vmul.f32 %v1217, %v1288
  %v1305 = vmul.f32 %v1219, %v1289
  %v1306 = vmul.f32 %v1270, %v1290
  %v1307 = vmul.f32 %v1272, %v1291
  %v1308 = vmul.f32 %v1223, %v1292
  %v1309 = vmul.f32 %v1225, %v1293
  %v1310 = vmul.f32 %v1276, %v1294
  %v1311 = vmul.f32 %v1278, %v1295
  %v1312 = vmul.f32 %v1227, %v1296
  %v1313 = vmul.f32 %v1229, %v1297
  %v1314 = vmul.f32 %v1280, %v1298
  %v1315 = vmul.f32 %v1282, %v1299
  %v1316 = vmul.f32 %v1300, 0.044715
  %v1317 = vmul.f32 %v1301, 0.044715
  %v1318 = vmul.f32 %v1302, 0.044715
  %v1319 = vmul.f32 %v1303, 0.044715
  %v1320 = vmul.f32 %v1304, 0.044715
  %v1321 = vmul.f32 %v1305, 0.044715
  %v1322 = vmul.f32 %v1306, 0.044715
  %v1323 = vmul.f32 %v1307, 0.044715
  %v1324 = vmul.f32 %v1308, 0.044715
  %v1325 = vmul.f32 %v1309, 0.044715
  %v1326 = vmul.f32 %v1310, 0.044715
  %v1327 = vmul.f32 %v1311, 0.044715
  %v1328 = vmul.f32 %v1312, 0.044715
  %v1329 = vmul.f32 %v1313, 0.044715
  %v1330 = vmul.f32 %v1314, 0.044715
  %v1331 = vmul.f32 %v1315, 0.044715
  %v1332 = vadd.f32 %v1213, %v1316
  %v1333 = vadd.f32 %v1215, %v1317
  %v1334 = vadd.f32 %v1266, %v1318
  %v1335 = vadd.f32 %v1268, %v1319
  %v1336 = vadd.f32 %v1217, %v1320
  %v1337 = vadd.f32 %v1219, %v1321
  %v1338 = vadd.f32 %v1270, %v1322
  %v1339 = vadd.f32 %v1272, %v1323
  %v1340 = vadd.f32 %v1223, %v1324
  %v1341 = vadd.f32 %v1225, %v1325
  %v1342 = vadd.f32 %v1276, %v1326
  %v1343 = vadd.f32 %v1278, %v1327
  %v1344 = vadd.f32 %v1227, %v1328
  %v1345 = vadd.f32 %v1229, %v1329
  %v1346 = vadd.f32 %v1280, %v1330
  %v1347 = vadd.f32 %v1282, %v1331
  %v1348 = vmul.f32 %v1332, 0.7978846
  %v1349 = vmul.f32 %v1333, 0.7978846
  %v1350 = vmul.f32 %v1334, 0.7978846
  %v1351 = vmul.f32 %v1335, 0.7978846
  %v1352 = vmul.f32 %v1336, 0.7978846
  %v1353 = vmul.f32 %v1337, 0.7978846
  %v1354 = vmul.f32 %v1338, 0.7978846
  %v1355 = vmul.f32 %v1339, 0.7978846
  %v1356 = vmul.f32 %v1340, 0.7978846
  %v1357 = vmul.f32 %v1341, 0.7978846
  %v1358 = vmul.f32 %v1342, 0.7978846
  %v1359 = vmul.f32 %v1343, 0.7978846
  %v1360 = vmul.f32 %v1344, 0.7978846
  %v1361 = vmul.f32 %v1345, 0.7978846
  %v1362 = vmul.f32 %v1346, 0.7978846
  %v1363 = vmul.f32 %v1347, 0.7978846
  %v1364 = vtanh.pop %v1348
  %v1365 = vtanh.pop %v1349
  %v1366 = vtanh.pop %v1350
  %v1367 = vtanh.pop %v1351
  %v1368 = vtanh.pop %v1352
  %v1369 = vtanh.pop %v1353
  %v1370 = vtanh.pop %v1354
  %v1371 = vtanh.pop %v1355
  %v1372 = vtanh.pop %v1356
  %v1373 = vtanh.pop %v1357
  %v1374 = vtanh.pop %v1358
  %v1375 = vtanh.pop %v1359
  %v1376 = vtanh.pop %v1360
  %v1377 = vtanh.pop %v1361
  %v1378 = vtanh.pop %v1362
  %v1379 = vtanh.pop %v1363
  %v1380 = vadd.f32 %v1364, 1.0
  %v1381 = vadd.f32 %v1365, 1.0
  %v1382 = vadd.f32 %v1366, 1.0
  %v1383 = vadd.f32 %v1367, 1.0
  %v1384 = vadd.f32 %v1368, 1.0
  %v1385 = vadd.f32 %v1369, 1.0
  %v1386 = vadd.f32 %v1370, 1.0
  %v1387 = vadd.f32 %v1371, 1.0
  %v1388 = vadd.f32 %v1372, 1.0
  %v1389 = vadd.f32 %v1373, 1.0
  %v1390 = vadd.f32 %v1374, 1.0
  %v1391 = vadd.f32 %v1375, 1.0
  %v1392 = vadd.f32 %v1376, 1.0
  %v1393 = vadd.f32 %v1377, 1.0
  %v1394 = vadd.f32 %v1378, 1.0
  %v1395 = vadd.f32 %v1379, 1.0
  %v1396 = vmul.f32 %v1380, 0.5
  %v1397 = vmul.f32 %v1381, 0.5
  %v1398 = vmul.f32 %v1382, 0.5
  %v1399 = vmul.f32 %v1383, 0.5
  %v1400 = vmul.f32 %v1384, 0.5
  %v1401 = vmul.f32 %v1385, 0.5
  %v1402 = vmul.f32 %v1386, 0.5
  %v1403 = vmul.f32 %v1387, 0.5
  %v1404 = vmul.f32 %v1388, 0.5
  %v1405 = vmul.f32 %v1389, 0.5
  %v1406 = vmul.f32 %v1390, 0.5
  %v1407 = vmul.f32 %v1391, 0.5
  %v1408 = vmul.f32 %v1392, 0.5
  %v1409 = vmul.f32 %v1393, 0.5
  %v1410 = vmul.f32 %v1394, 0.5
  %v1411 = vmul.f32 %v1395, 0.5
  %v1412 = vmul.f32 %v1213, %v1396
  %v1413 = vmul.f32 %v1215, %v1397
  %v1414 = vmul.f32 %v1266, %v1398
  %v1415 = vmul.f32 %v1268, %v1399
  %v1416 = vmul.f32 %v1217, %v1400
  %v1417 = vmul.f32 %v1219, %v1401
  %v1418 = vmul.f32 %v1270, %v1402
  %v1419 = vmul.f32 %v1272, %v1403
  %v1420 = vmul.f32 %v1223, %v1404
  %v1421 = vmul.f32 %v1225, %v1405
  %v1422 = vmul.f32 %v1276, %v1406
  %v1423 = vmul.f32 %v1278, %v1407
  %v1424 = vmul.f32 %v1227, %v1408
  %v1425 = vmul.f32 %v1229, %v1409
  %v1426 = vmul.f32 %v1280, %v1410
  %v1427 = vmul.f32 %v1282, %v1411
  %v1428 = vpack.c.bf16 %v1416, %v1412
  %v1429 = vpack.c.bf16 %v1417, %v1413
  %v1430 = vpack.c.bf16 %v1418, %v1414
  %v1431 = vpack.c.bf16 %v1419, %v1415
  %v1432 = vpack.c.bf16 %v1424, %v1420
  %v1433 = vpack.c.bf16 %v1425, %v1421
  %v1434 = vpack.c.bf16 %v1426, %v1422
  %v1435 = vpack.c.bf16 %v1427, %v1423
  %v1436 = vld [vmem:[%s6] sm:$0xf]
  %v1437 = vld [vmem:[%s6 + $0x4] sm:$0xf]
  %v1438 = vld [vmem:[%s6 + $0x8] sm:$0xf]
  %v1439 = vld [vmem:[%s6 + $0xc] sm:$0xf]
  %v1440 = vld [vmem:[%s6 + $0x10] sm:$0xf]
  %v1441 = vld [vmem:[%s6 + $0x14] sm:$0xf]
  %v1442 = vld [vmem:[%s6 + $0x18] sm:$0xf]
  %v1443 = vld [vmem:[%s6 + $0x1c] sm:$0xf]
  %v1444 = vld [vmem:[%s6 + $0x20] sm:$0xf]
  %v1445 = vld [vmem:[%s6 + $0x24] sm:$0xf]
  %v1446 = vld [vmem:[%s6 + $0x28] sm:$0xf]
  %v1447 = vld [vmem:[%s6 + $0x2c] sm:$0xf]
  %v1448 = vld [vmem:[%s6 + $0x30] sm:$0xf]
  %v1449 = vld [vmem:[%s6 + $0x34] sm:$0xf]
  %v1450 = vld [vmem:[%s6 + $0x38] sm:$0xf]
  %v1451 = vld [vmem:[%s6 + $0x3c] sm:$0xf]
  %v1452 = vld [vmem:[%s6 + $0x40] sm:$0xf]
  %v1453 = vld [vmem:[%s6 + $0x44] sm:$0xf]
  %v1454 = vld [vmem:[%s6 + $0x48] sm:$0xf]
  %v1455 = vld [vmem:[%s6 + $0x4c] sm:$0xf]
  %v1456 = vld [vmem:[%s6 + $0x50] sm:$0xf]
  %v1457 = vld [vmem:[%s6 + $0x54] sm:$0xf]
  %v1458 = vld [vmem:[%s6 + $0x58] sm:$0xf]
  %v1459 = vld [vmem:[%s6 + $0x5c] sm:$0xf]
  %v1460 = vld [vmem:[%s6 + $0x60] sm:$0xf]
  %v1461 = vld [vmem:[%s6 + $0x64] sm:$0xf]
  %v1462 = vld [vmem:[%s6 + $0x68] sm:$0xf]
  %v1463 = vld [vmem:[%s6 + $0x6c] sm:$0xf]
  %v1464 = vld [vmem:[%s6 + $0x70] sm:$0xf]
  %v1465 = vld [vmem:[%s6 + $0x74] sm:$0xf]
  %v1466 = vld [vmem:[%s6 + $0x78] sm:$0xf]
  %v1467 = vld [vmem:[%s6 + $0x7c] sm:$0xf]
  %v1468 = vld [vmem:[%s6 + $0x80] sm:$0xf]
  %v1469 = vld [vmem:[%s6 + $0x84] sm:$0xf]
  %v1470 = vld [vmem:[%s6 + $0x88] sm:$0xf]
  %v1471 = vld [vmem:[%s6 + $0x8c] sm:$0xf]
  %v1472 = vld [vmem:[%s6 + $0x90] sm:$0xf]
  %v1473 = vld [vmem:[%s6 + $0x94] sm:$0xf]
  %v1474 = vld [vmem:[%s6 + $0x98] sm:$0xf]
  %v1475 = vld [vmem:[%s6 + $0x9c] sm:$0xf]
  %v1476 = vld [vmem:[%s6 + $0xa0] sm:$0xf]
  %v1477 = vld [vmem:[%s6 + $0xa4] sm:$0xf]
  %v1478 = vld [vmem:[%s6 + $0xa8] sm:$0xf]
  %v1479 = vld [vmem:[%s6 + $0xac] sm:$0xf]
  %v1480 = vld [vmem:[%s6 + $0xb0] sm:$0xf]
  %v1481 = vld [vmem:[%s6 + $0xb4] sm:$0xf]
  %v1482 = vld [vmem:[%s6 + $0xb8] sm:$0xf]
  %v1483 = vld [vmem:[%s6 + $0xbc] sm:$0xf]
  %v1484 = vld [vmem:[%s6 + $0xc0] sm:$0xf]
  %v1485 = vld [vmem:[%s6 + $0xc4] sm:$0xf]
  %v1486 = vld [vmem:[%s6 + $0xc8] sm:$0xf]
  %v1487 = vld [vmem:[%s6 + $0xcc] sm:$0xf]
  %v1488 = vld [vmem:[%s6 + $0xd0] sm:$0xf]
  %v1489 = vld [vmem:[%s6 + $0xd4] sm:$0xf]
  %v1490 = vld [vmem:[%s6 + $0xd8] sm:$0xf]
  %v1491 = vld [vmem:[%s6 + $0xdc] sm:$0xf]
  %v1492 = vld [vmem:[%s6 + $0xe0] sm:$0xf]
  %v1493 = vld [vmem:[%s6 + $0xe4] sm:$0xf]
  %v1494 = vld [vmem:[%s6 + $0xe8] sm:$0xf]
  %v1495 = vld [vmem:[%s6 + $0xec] sm:$0xf]
  %v1496 = vld [vmem:[%s6 + $0xf0] sm:$0xf]
  %v1497 = vld [vmem:[%s6 + $0xf4] sm:$0xf]
  %v1498 = vld [vmem:[%s6 + $0xf8] sm:$0xf]
  %v1499 = vld [vmem:[%s6 + $0xfc] sm:$0xf]
  %v1500 = vlaneseq
  %v1501 = vshrl.u32 %v1500, 7
  %v1502 = vsub.s32 6, %v1501
  %v1503 = vrot.slane %v33, %v1502
  %v1568 = vunpack.c.l.b16 %v1436
  %v1569 = vunpack.c.l.b16 %v1437
  %v1570 = vunpack.c.l.b16 %v1438
  %v1571 = vunpack.c.l.b16 %v1439
  %v1572 = vunpack.c.l.b16 %v1440
  %v1573 = vunpack.c.l.b16 %v1441
  %v1574 = vunpack.c.l.b16 %v1442
  %v1575 = vunpack.c.l.b16 %v1443
  %v1576 = vunpack.c.l.b16 %v1444
  %v1577 = vunpack.c.l.b16 %v1445
  %v1578 = vunpack.c.l.b16 %v1446
  %v1579 = vunpack.c.l.b16 %v1447
  %v1580 = vunpack.c.l.b16 %v1448
  %v1581 = vunpack.c.l.b16 %v1449
  %v1582 = vunpack.c.l.b16 %v1450
  %v1583 = vunpack.c.l.b16 %v1451
  %v1584 = vunpack.c.l.b16 %v1452
  %v1585 = vunpack.c.l.b16 %v1453
  %v1586 = vunpack.c.l.b16 %v1454
  %v1587 = vunpack.c.l.b16 %v1455
  %v1588 = vunpack.c.l.b16 %v1456
  %v1589 = vunpack.c.l.b16 %v1457
  %v1590 = vunpack.c.l.b16 %v1458
  %v1591 = vunpack.c.l.b16 %v1459
  %v1592 = vunpack.c.l.b16 %v1460
  %v1593 = vunpack.c.l.b16 %v1461
  %v1594 = vunpack.c.l.b16 %v1462
  %v1595 = vunpack.c.l.b16 %v1463
  %v1596 = vunpack.c.l.b16 %v1464
  %v1597 = vunpack.c.l.b16 %v1465
  %v1598 = vunpack.c.l.b16 %v1466
  %v1599 = vunpack.c.l.b16 %v1467
  %v1600 = vunpack.c.l.b16 %v1468
  %v1601 = vunpack.c.l.b16 %v1469
  %v1602 = vunpack.c.l.b16 %v1470
  %v1603 = vunpack.c.l.b16 %v1471
  %v1604 = vunpack.c.l.b16 %v1472
  %v1605 = vunpack.c.l.b16 %v1473
  %v1606 = vunpack.c.l.b16 %v1474
  %v1607 = vunpack.c.l.b16 %v1475
  %v1608 = vunpack.c.l.b16 %v1476
  %v1609 = vunpack.c.l.b16 %v1477
  %v1610 = vunpack.c.l.b16 %v1478
  %v1611 = vunpack.c.l.b16 %v1479
  %v1612 = vunpack.c.l.b16 %v1480
  %v1613 = vunpack.c.l.b16 %v1481
  %v1614 = vunpack.c.l.b16 %v1482
  %v1615 = vunpack.c.l.b16 %v1483
  %v1616 = vunpack.c.l.b16 %v1484
  %v1617 = vunpack.c.l.b16 %v1485
  %v1618 = vunpack.c.l.b16 %v1486
  %v1619 = vunpack.c.l.b16 %v1487
  %v1620 = vunpack.c.l.b16 %v1488
  %v1621 = vunpack.c.l.b16 %v1489
  %v1622 = vunpack.c.l.b16 %v1490
  %v1623 = vunpack.c.l.b16 %v1491
  %v1624 = vunpack.c.l.b16 %v1492
  %v1625 = vunpack.c.l.b16 %v1493
  %v1626 = vunpack.c.l.b16 %v1494
  %v1627 = vunpack.c.l.b16 %v1495
  %v1628 = vunpack.c.l.b16 %v1496
  %v1629 = vunpack.c.l.b16 %v1497
  %v1630 = vunpack.c.l.b16 %v1498
  %v1631 = vunpack.c.l.b16 %v1499
  %v1632 = vpack.c.b16 %v1569, %v1568
  %v1633 = vpack.c.b16 %v1571, %v1570
  %v1634 = vpack.c.b16 %v1573, %v1572
  %v1635 = vpack.c.b16 %v1575, %v1574
  %v1636 = vpack.c.b16 %v1577, %v1576
  %v1637 = vpack.c.b16 %v1579, %v1578
  %v1638 = vpack.c.b16 %v1581, %v1580
  %v1639 = vpack.c.b16 %v1583, %v1582
  %v1640 = vpack.c.b16 %v1585, %v1584
  %v1641 = vpack.c.b16 %v1587, %v1586
  %v1642 = vpack.c.b16 %v1589, %v1588
  %v1643 = vpack.c.b16 %v1591, %v1590
  %v1644 = vpack.c.b16 %v1593, %v1592
  %v1645 = vpack.c.b16 %v1595, %v1594
  %v1646 = vpack.c.b16 %v1597, %v1596
  %v1647 = vpack.c.b16 %v1599, %v1598
  %v1648 = vpack.c.b16 %v1601, %v1600
  %v1649 = vpack.c.b16 %v1603, %v1602
  %v1650 = vpack.c.b16 %v1605, %v1604
  %v1651 = vpack.c.b16 %v1607, %v1606
  %v1652 = vpack.c.b16 %v1609, %v1608
  %v1653 = vpack.c.b16 %v1611, %v1610
  %v1654 = vpack.c.b16 %v1613, %v1612
  %v1655 = vpack.c.b16 %v1615, %v1614
  %v1656 = vpack.c.b16 %v1617, %v1616
  %v1657 = vpack.c.b16 %v1619, %v1618
  %v1658 = vpack.c.b16 %v1621, %v1620
  %v1659 = vpack.c.b16 %v1623, %v1622
  %v1660 = vpack.c.b16 %v1625, %v1624
  %v1661 = vpack.c.b16 %v1627, %v1626
  %v1662 = vpack.c.b16 %v1629, %v1628
  %v1663 = vpack.c.b16 %v1631, %v1630
  %1696 = vmatprep.subr.bf16.mxu0 0
  %1697 = vmatpush1.bf16.msra.mxu0 %v1632
  %1698 = vmatprep.subr.bf16.mxu0 0
  %1699 = vmatpush1.bf16.msra.mxu0 %v1633
  %1700 = vmatprep.subr.bf16.mxu0 0
  %1701 = vmatpush1.bf16.msra.mxu0 %v1634
  %1702 = vmatprep.subr.bf16.mxu0 0
  %1703 = vmatpush1.bf16.msra.mxu0 %v1635
  %1704 = vmatprep.subr.bf16.mxu0 0
  %1705 = vmatpush1.bf16.msra.mxu0 %v1636
  %1706 = vmatprep.subr.bf16.mxu0 0
  %1707 = vmatpush1.bf16.msra.mxu0 %v1637
  %1708 = vmatprep.subr.bf16.mxu0 0
  %1709 = vmatpush1.bf16.msra.mxu0 %v1638
  %1710 = vmatprep.subr.bf16.mxu0 0
  %1711 = vmatpush1.bf16.msra.mxu0 %v1639
  %1712 = vmatprep.subr.bf16.mxu0 0
  %1713 = vmatpush1.bf16.msra.mxu0 %v1640
  %1714 = vmatprep.subr.bf16.mxu0 0
  %1715 = vmatpush1.bf16.msra.mxu0 %v1641
  %1716 = vmatprep.subr.bf16.mxu0 0
  %1717 = vmatpush1.bf16.msra.mxu0 %v1642
  %1718 = vmatprep.subr.bf16.mxu0 0
  %1719 = vmatpush1.bf16.msra.mxu0 %v1643
  %1720 = vmatprep.subr.bf16.mxu0 0
  %1721 = vmatpush1.bf16.msra.mxu0 %v1644
  %1722 = vmatprep.subr.bf16.mxu0 0
  %1723 = vmatpush1.bf16.msra.mxu0 %v1645
  %1724 = vmatprep.subr.bf16.mxu0 0
  %1725 = vmatpush1.bf16.msra.mxu0 %v1646
  %1726 = vmatprep.subr.bf16.mxu0 0
  %1727 = vmatpush1.bf16.msra.mxu0 %v1647
  %1728 = vmatprep.mubr.bf16.mxu0 %v1429
  %1729 = vmatmul.mubr.bf16.gmra.mrb[0].mxu0 %v1428
  %v1730 = vpop.f32.mrb[0].mxu0
  %v1731 = vadd.f32 %v1503, %v1730
  %v1732 = vpop.f32.mrb[0].mxu0
  %v1733 = vpop.f32.mrb[0].mxu0
  %v1734 = vadd.f32 %v1503, %v1733
  %v1735 = vpop.f32.mrb[0].mxu0
  %1736 = vmatprep.mubr.bf16.mxu0 %v1433
  %1737 = vmatmul.mubr.bf16.gmra.mrb[0].mxu0 %v1432
  %v1738 = vpop.f32.mrb[0].mxu0
  %v1739 = vadd.f32 %v1503, %v1738
  %v1740 = vpop.f32.mrb[0].mxu0
  %v1741 = vpop.f32.mrb[0].mxu0
  %v1742 = vadd.f32 %v1503, %v1741
  %v1743 = vpop.f32.mrb[0].mxu0
  %1744 = vdwg.mxu0
  %1745 = vmatprep.subr.bf16.mxu0 0
  %1746 = vmatpush1.bf16.msra.mxu0 %v1648
  %1747 = vmatprep.subr.bf16.mxu0 0
  %1748 = vmatpush1.bf16.msra.mxu0 %v1649
  %1749 = vmatprep.subr.bf16.mxu0 0
  %1750 = vmatpush1.bf16.msra.mxu0 %v1650
  %1751 = vmatprep.subr.bf16.mxu0 0
  %1752 = vmatpush1.bf16.msra.mxu0 %v1651
  %1753 = vmatprep.subr.bf16.mxu0 0
  %1754 = vmatpush1.bf16.msra.mxu0 %v1652
  %1755 = vmatprep.subr.bf16.mxu0 0
  %1756 = vmatpush1.bf16.msra.mxu0 %v1653
  %1757 = vmatprep.subr.bf16.mxu0 0
  %1758 = vmatpush1.bf16.msra.mxu0 %v1654
  %1759 = vmatprep.subr.bf16.mxu0 0
  %1760 = vmatpush1.bf16.msra.mxu0 %v1655
  %1761 = vmatprep.subr.bf16.mxu0 0
  %1762 = vmatpush1.bf16.msra.mxu0 %v1656
  %1763 = vmatprep.subr.bf16.mxu0 0
  %1764 = vmatpush1.bf16.msra.mxu0 %v1657
  %1765 = vmatprep.subr.bf16.mxu0 0
  %1766 = vmatpush1.bf16.msra.mxu0 %v1658
  %1767 = vmatprep.subr.bf16.mxu0 0
  %1768 = vmatpush1.bf16.msra.mxu0 %v1659
  %1769 = vmatprep.subr.bf16.mxu0 0
  %1770 = vmatpush1.bf16.msra.mxu0 %v1660
  %1771 = vmatprep.subr.bf16.mxu0 0
  %1772 = vmatpush1.bf16.msra.mxu0 %v1661
  %1773 = vmatprep.subr.bf16.mxu0 0
  %1774 = vmatpush1.bf16.msra.mxu0 %v1662
  %1775 = vmatprep.subr.bf16.mxu0 0
  %1776 = vmatpush1.bf16.msra.mxu0 %v1663
  %1777 = vmatprep.mubr.bf16.mxu0 %v1431
  %1778 = vmatmul.mubr.bf16.gmra.mrb[0].mxu0 %v1430
  %v1779 = vpop.f32.mrb[0].mxu0
  %v1780 = vadd.f32 %v1731, %v1779
  %v1781 = vpop.f32.mrb[0].mxu0
  %v1782 = vpop.f32.mrb[0].mxu0
  %v1783 = vadd.f32 %v1734, %v1782
  %v1784 = vpop.f32.mrb[0].mxu0
  %1785 = vmatprep.mubr.bf16.mxu0 %v1435
  %1786 = vmatmul.mubr.bf16.gmra.mrb[0].mxu0 %v1434
  %v1787 = vpop.f32.mrb[0].mxu0
  %v1788 = vadd.f32 %v1739, %v1787
  %v1789 = vpop.f32.mrb[0].mxu0
  %v1790 = vpop.f32.mrb[0].mxu0
  %v1791 = vadd.f32 %v1742, %v1790
  %v1792 = vpop.f32.mrb[0].mxu0
  %1793 = vdwg.mxu0
  %v1794 = vlaneseq
  %v1795 = vshrl.u32 %v1794, 7
  %v1796 = vsub.s32 7, %v1795
  %v1797 = vrot.slane %v33, %v1796
  %v1798 = vmul.f32 %v1797, %v1780
  %v1799 = vmul.f32 %v1797, %v1783
  %v1800 = vmul.f32 %v1797, %v1788
  %v1801 = vmul.f32 %v1797, %v1791
  %v1802 = vadd.f32 %v225, %v1798
  %v1803 = vadd.f32 %v226, %v1799
  %v1804 = vadd.f32 %v227, %v1800
  %v1805 = vadd.f32 %v228, %v1801
  %v1806 = vadd.f32 %v1802, %v1803
  %v1807 = vrot.slane %v1806, 4
  %v1808 = vadd.f32 %v1806, %v1807
  %v1809 = vrot.slane %v1808, 2
  %v1810 = vadd.f32 %v1808, %v1809
  %v1811 = vrot.slane %v1810, 1
  %v1812 = vadd.f32 %v1810, %v1811
  %v1813 = vadd.f32 %v1804, %v1805
  %v1814 = vrot.slane %v1813, 4
  %v1815 = vadd.f32 %v1813, %v1814
  %v1816 = vrot.slane %v1815, 2
  %v1817 = vadd.f32 %v1815, %v1816
  %v1818 = vrot.slane %v1817, 1
  %v1819 = vadd.f32 %v1817, %v1818
  %v1820 = vrcp.pop 16.0
  %v1821 = vmul.f32 %v1812, %v1820
  %v1822 = vmul.f32 %v1819, %v1820
  %vm1825 = vcmask 1041409
  %v1826 = vsel %vm1825, %v1822, %v1821
  %vm1828 = vcmask 1041408
  %v1829 = vsel %vm1828, %v1826, 0.0
  %1830 = vadd.xlane.f32.xlu0 %v1829
  %v1831 = vpop.xlane.xlu0 %1830
  %v1832 = vmul.f32 %v1831, %v176
  %v1833 = vsub.f32 %v1829, %v1832
  %v1834 = vmul.f32 %v1833, %v1833
  %1835 = vadd.xlane.f32.xlu0 %v1834
  %v1836 = vpop.xlane.xlu0 %1835
  %v1837 = vmul.f32 %v1836, %v176
  %v1838 = vadd.f32 %v1837, 1e-06
  %v1839 = vrsqrt.pop %v1838
  %v1840 = vmul.f32 %v1833, %v1839
  %v1841 = vlaneseq
  %v1842 = vshrl.u32 %v1841, 7
  %v1843 = vsub.s32 0, %v1842
  %v1844 = vrot.slane %v34, %v1843
  %v1845 = vmul.f32 %v1840, %v1844
  %v1846 = vlaneseq
  %v1847 = vshrl.u32 %v1846, 7
  %v1848 = vsub.s32 1, %v1847
  %v1849 = vrot.slane %v34, %v1848
  %v1850 = vadd.f32 %v1845, %v1849
  %v1851 = vpack.c.bf16 %v1850, %v1850
  %v1852 = vld [vmem:[%s7] sm:$0xf]
  %v1853 = vld [vmem:[%s7 + $0x4] sm:$0xf]
  %v1854 = vld [vmem:[%s7 + $0x8] sm:$0xf]
  %v1855 = vld [vmem:[%s7 + $0xc] sm:$0xf]
  %v1856 = vld [vmem:[%s7 + $0x10] sm:$0xf]
  %v1857 = vld [vmem:[%s7 + $0x14] sm:$0xf]
  %v1858 = vld [vmem:[%s7 + $0x18] sm:$0xf]
  %v1859 = vld [vmem:[%s7 + $0x1c] sm:$0xf]
  %v1860 = vld [vmem:[%s7 + $0x20] sm:$0xf]
  %v1861 = vld [vmem:[%s7 + $0x24] sm:$0xf]
  %v1862 = vld [vmem:[%s7 + $0x28] sm:$0xf]
  %v1863 = vld [vmem:[%s7 + $0x2c] sm:$0xf]
  %v1864 = vld [vmem:[%s7 + $0x30] sm:$0xf]
  %v1865 = vld [vmem:[%s7 + $0x34] sm:$0xf]
  %v1866 = vld [vmem:[%s7 + $0x38] sm:$0xf]
  %v1867 = vld [vmem:[%s7 + $0x3c] sm:$0xf]
  %v1868 = vld [vmem:[%s8] sm:$0x1]
  %v1870 = vlaneseq
  %v1871 = vshrl.u32 %v1870, 7
  %v1872 = vsub.s32 0, %v1871
  %v1873 = vrot.slane %v1868, %v1872
  %v1891 = vunpack.c.l.b16 %v1852
  %v1892 = vunpack.c.l.b16 %v1853
  %v1893 = vunpack.c.l.b16 %v1854
  %v1894 = vunpack.c.l.b16 %v1855
  %v1895 = vunpack.c.l.b16 %v1856
  %v1896 = vunpack.c.l.b16 %v1857
  %v1897 = vunpack.c.l.b16 %v1858
  %v1898 = vunpack.c.l.b16 %v1859
  %v1899 = vunpack.c.l.b16 %v1860
  %v1900 = vunpack.c.l.b16 %v1861
  %v1901 = vunpack.c.l.b16 %v1862
  %v1902 = vunpack.c.l.b16 %v1863
  %v1903 = vunpack.c.l.b16 %v1864
  %v1904 = vunpack.c.l.b16 %v1865
  %v1905 = vunpack.c.l.b16 %v1866
  %v1906 = vunpack.c.l.b16 %v1867
  %v1907 = vpack.c.b16 %v1892, %v1891
  %v1908 = vpack.c.b16 %v1894, %v1893
  %v1909 = vpack.c.b16 %v1896, %v1895
  %v1910 = vpack.c.b16 %v1898, %v1897
  %v1911 = vpack.c.b16 %v1900, %v1899
  %v1912 = vpack.c.b16 %v1902, %v1901
  %v1913 = vpack.c.b16 %v1904, %v1903
  %v1914 = vpack.c.b16 %v1906, %v1905
  %1923 = vmatprep.subr.bf16.mxu0 0
  %1924 = vmatpush1.bf16.msra.mxu0 %v1907
  %1925 = vmatprep.subr.bf16.mxu0 0
  %1926 = vmatpush1.bf16.msra.mxu0 %v1908
  %1927 = vmatprep.subr.bf16.mxu0 0
  %1928 = vmatpush1.bf16.msra.mxu0 %v1909
  %1929 = vmatprep.subr.bf16.mxu0 0
  %1930 = vmatpush1.bf16.msra.mxu0 %v1910
  %1931 = vmatprep.subr.bf16.mxu0 0
  %1932 = vmatpush1.bf16.msra.mxu0 %v1911
  %1933 = vmatprep.subr.bf16.mxu0 0
  %1934 = vmatpush1.bf16.msra.mxu0 %v1912
  %1935 = vmatprep.subr.bf16.mxu0 0
  %1936 = vmatpush1.bf16.msra.mxu0 %v1913
  %1937 = vmatprep.subr.bf16.mxu0 0
  %1938 = vmatpush1.bf16.msra.mxu0 %v1914
  %1939 = vmatprep.subr.bf16.mxu0 0
  %1940 = vmatpush1.bf16.msra.mxu0 0
  %1941 = vmatprep.subr.bf16.mxu0 0
  %1942 = vmatpush1.bf16.msra.mxu0 0
  %1943 = vmatprep.subr.bf16.mxu0 0
  %1944 = vmatpush1.bf16.msra.mxu0 0
  %1945 = vmatprep.subr.bf16.mxu0 0
  %1946 = vmatpush1.bf16.msra.mxu0 0
  %1947 = vmatprep.subr.bf16.mxu0 0
  %1948 = vmatpush1.bf16.msra.mxu0 0
  %1949 = vmatprep.subr.bf16.mxu0 0
  %1950 = vmatpush1.bf16.msra.mxu0 0
  %1951 = vmatprep.subr.bf16.mxu0 0
  %1952 = vmatpush1.bf16.msra.mxu0 0
  %1953 = vmatprep.subr.bf16.mxu0 0
  %1954 = vmatpush1.bf16.msra.mxu0 0
  %1955 = vmatprep.mubr.bf16.mxu0 0
  %1956 = vmatmul.mubr.bf16.gmra.mrb[0].mxu0 %v1851
  %v1957 = vpop.f32.mrb[0].mxu0
  %v1958 = vadd.f32 %v1873, %v1957
  %v1959 = vpop.f32.mrb[0].mxu0
  %v1960 = vpop.f32.mrb[0].mxu0
  %v1961 = vpop.f32.mrb[0].mxu0
  %1962 = vdwg.mxu0
  %1963 = vst [vmem:[%s9] sm:$0xff] %v1958
  // Predicated region
  $region38: #{forward.1} parent=0 // pred_check
    _
  $region39: #{forward.1} parent=0 // pred_check_branch
    %1965 = sbr.rel (0) target = $region41
  $region40: #{forward.1} parent=0 // pred_region
    _
  $region41: #{forward.1} parent=0 // pred_fallthru
    _
  // Predicated region
  $region42: #{forward.1} parent=0 // pred_check
    _
  $region43: #{forward.1} parent=0 // pred_check_branch
    %1967 = sbr.rel (0) target = $region45
  $region44: #{forward.1} parent=0 // pred_region
    _
  $region45: #{forward.1} parent=0 // pred_fallthru
    _

</llo_original>
